<compile_context>
chip_gen: v6e
topology: v6e:2x2x1
jax: 0.10.0
libtpu: 0.0.40
codegen_flags: <defaults>
</compile_context>

<pallas_src>
import functools

import numpy as np
import jax
import jax.numpy as jnp
from jax import lax
from jax.experimental import pallas as pl
from jax.experimental.pallas import tpu as pltpu

_BN_EPS = 1e-5
_COMPILER_PARAMS = pltpu.CompilerParams(vmem_limit_bytes=32 * 1024 * 1024)


# ----------------------------------------------------------------------------
# Pallas kernels
# ----------------------------------------------------------------------------
def _mm_kernel(a_ref, b_ref, g_ref, bt_ref, o_ref, *, relu_in, fuse_bn):
    """Fused (ReLU ->) matmul (-> train-mode BatchNorm) on a single VMEM block.

    a: (M, K) bf16   b: (K, N) bf16   g/bt: (1, N) f32   o: (M, N) bf16
    """
    a = a_ref[...]
    if relu_in:
        a = jnp.maximum(a, 0.0)
    y = jnp.dot(a, b_ref[...], preferred_element_type=jnp.float32)
    if fuse_bn:
        mean = jnp.mean(y, axis=0, keepdims=True)
        yc = y - mean
        var = jnp.mean(yc * yc, axis=0, keepdims=True)
        y = yc * lax.rsqrt(var + _BN_EPS) * g_ref[...] + bt_ref[...]
    o_ref[...] = y.astype(o_ref.dtype)


def _dw_kernel(x_ref, w_ref, o_ref, *, kh, kw, dil, relu_in):
    """Depthwise conv (stride 1) as kh*kw shifted MACs on the VPU, channels in lanes.

    x: (N, Hp, Wp, C) bf16 (pre-padded)   w: (kh*kw, 1, 1, C) f32   o: (N, Ho, Wo, C)
    """
    x = x_ref[...].astype(jnp.float32)
    if relu_in:
        x = jnp.maximum(x, 0.0)
    ho, wo = o_ref.shape[1], o_ref.shape[2]
    acc = jnp.zeros(o_ref.shape, jnp.float32)
    for i in range(kh):
        for j in range(kw):
            tap = x[:, i * dil:i * dil + ho, j * dil:j * dil + wo, :]
            acc = acc + tap * w_ref[i * kw + j]
    o_ref[...] = acc.astype(o_ref.dtype)


def _bn_kernel(x_ref, g_ref, b_ref, o_ref):
    """Train-mode BatchNorm on an (M, C) view (used after pooling ops)."""
    x = x_ref[...].astype(jnp.float32)
    mean = jnp.mean(x, axis=0, keepdims=True)
    xc = x - mean
    var = jnp.mean(xc * xc, axis=0, keepdims=True)
    o_ref[...] = (xc * lax.rsqrt(var + _BN_EPS) * g_ref[...]
                  + b_ref[...]).astype(o_ref.dtype)


def _head_kernel(x_ref, w_ref, b_ref, o_ref):
    """Global average pool over spatial fused with the Linear classifier."""
    feat = jnp.mean(x_ref[...].astype(jnp.float32), axis=1)          # (N, C)
    o_ref[...] = jnp.dot(feat, w_ref[...],
                         preferred_element_type=jnp.float32) + b_ref[...]


# ----------------------------------------------------------------------------
# Pallas wrappers
# ----------------------------------------------------------------------------
@functools.partial(jax.jit, static_argnames=("relu_in", "fuse_bn"))
def fused_matmul(a, b, gamma, beta, *, relu_in=False, fuse_bn=False):
    m, _ = a.shape
    n = b.shape[1]
    kern = functools.partial(_mm_kernel, relu_in=relu_in, fuse_bn=fuse_bn)
    return pl.pallas_call(
        kern,
        out_shape=jax.ShapeDtypeStruct((m, n), jnp.bfloat16),
        compiler_params=_COMPILER_PARAMS,
    )(a.astype(jnp.bfloat16), b.astype(jnp.bfloat16),
      gamma.reshape(1, n).astype(jnp.float32),
      beta.reshape(1, n).astype(jnp.float32))


@functools.partial(jax.jit, static_argnames=("k", "dil", "relu_in"))
def depthwise_conv(x, w, *, k, dil=1, relu_in=True):
    """Depthwise conv, stride 1, 'same' padding, NHWC.  w: (C, 1, k, k) torch layout."""
    n, h, wd, c = x.shape
    pad = dil * (k - 1) // 2
    xp = jnp.pad(x, ((0, 0), (pad, pad), (pad, pad), (0, 0)))
    wt = jnp.transpose(w.reshape(c, k * k), (1, 0)).reshape(k * k, 1, 1, c)
    wt = wt.astype(jnp.float32)
    kern = functools.partial(_dw_kernel, kh=k, kw=k, dil=dil, relu_in=relu_in)
    return pl.pallas_call(
        kern,
        out_shape=jax.ShapeDtypeStruct((n, h, wd, c), jnp.bfloat16),
        compiler_params=_COMPILER_PARAMS,
    )(xp, wt)


@jax.jit
def batch_norm(x, gamma, beta):
    n, h, w, c = x.shape
    out = pl.pallas_call(
        _bn_kernel,
        out_shape=jax.ShapeDtypeStruct((n * h * w, c), jnp.bfloat16),
        compiler_params=_COMPILER_PARAMS,
    )(x.reshape(n * h * w, c),
      gamma.reshape(1, c).astype(jnp.float32),
      beta.reshape(1, c).astype(jnp.float32))
    return out.reshape(n, h, w, c)


@jax.jit
def head_forward(x, w, b):
    n, h, wd, c = x.shape
    return pl.pallas_call(
        _head_kernel,
        out_shape=jax.ShapeDtypeStruct((n, w.shape[1]), jnp.float32),
        compiler_params=_COMPILER_PARAMS,
    )(x.reshape(n, h * wd, c), w.astype(jnp.float32),
      b.reshape(1, -1).astype(jnp.float32))


# ----------------------------------------------------------------------------
# Convolution helpers (NHWC, bf16 activations)
# ----------------------------------------------------------------------------
def pointwise_conv(x, w, gamma=None, beta=None, *, relu_in=False, fuse_bn=False):
    """1x1 conv (stride 1) via the fused matmul kernel.  w: (Cout, Cin, 1, 1)."""
    n, h, wd, cin = x.shape
    cout = w.shape[0]
    if gamma is None:
        gamma = jnp.ones((cout,), jnp.float32)
        beta = jnp.zeros((cout,), jnp.float32)
    wmat = jnp.transpose(w.reshape(cout, cin), (1, 0))
    y = fused_matmul(x.reshape(n * h * wd, cin), wmat, gamma, beta,
                     relu_in=relu_in, fuse_bn=fuse_bn)
    return y.reshape(n, h, wd, cout)


@functools.partial(jax.jit, static_argnames=("stride", "padding", "dilation",
                                             "groups", "relu_in", "fuse_bn"))
def conv_im2col(x, w, gamma=None, beta=None, *, stride=(1, 1), padding=(0, 0),
                dilation=(1, 1), groups=1, relu_in=False, fuse_bn=False):
    """General (possibly grouped) conv: im2col + ONE dense fused Pallas matmul.

    Grouped weights are embedded block-diagonally so all groups share a single MXU
    call (used only for the stem 3x3 and the reduction-cell groups=8 convs).
    w: (Cout, Cin//groups, kh, kw) torch layout.
    """
    n, h, wd, cin = x.shape
    cout, cg, kh, kw = w.shape
    assert cin == cg * groups
    sh, sw = stride
    ph, pw = padding
    dh, dw = dilation
    ho = (h + 2 * ph - dh * (kh - 1) - 1) // sh + 1
    wo = (wd + 2 * pw - dw * (kw - 1) - 1) // sw + 1

    xp = jnp.pad(x, ((0, 0), (ph, ph), (pw, pw), (0, 0)))
    cols = []
    for i in range(kh):
        for j in range(kw):
            cols.append(xp[:, i * dh:i * dh + (ho - 1) * sh + 1:sh,
                           j * dw:j * dw + (wo - 1) * sw + 1:sw, :])
    a = jnp.concatenate(cols, axis=-1).reshape(n * ho * wo, kh * kw * cin)

    coutg = cout // groups
    dense = jnp.zeros((kh * kw, cin, cout), jnp.float32)
    for g in range(groups):
        wg = w[g * coutg:(g + 1) * coutg].reshape(coutg, cg, kh * kw)
        dense = dense.at[:, g * cg:(g + 1) * cg, g * coutg:(g + 1) * coutg].set(
            jnp.transpose(wg, (2, 1, 0)))
    dense = dense.reshape(kh * kw * cin, cout)

    if gamma is None:
        gamma = jnp.ones((cout,), jnp.float32)
        beta = jnp.zeros((cout,), jnp.float32)
    y = fused_matmul(a, dense, gamma, beta, relu_in=relu_in, fuse_bn=fuse_bn)
    return y.reshape(n, ho, wo, cout)


def _pool3x3(x, kind, stride):
    xf = x.astype(jnp.float32)
    dims, strides = (1, 3, 3, 1), (1, stride, stride, 1)
    padding = ((0, 0), (1, 1), (1, 1), (0, 0))
    if kind == "max":
        return lax.reduce_window(xf, -jnp.inf, lax.max, dims, strides, padding)
    s = lax.reduce_window(xf, 0.0, lax.add, dims, strides, padding)
    cnt = lax.reduce_window(jnp.ones_like(xf), 0.0, lax.add, dims, strides, padding)
    return s / cnt                               # count_include_pad=False


def pool_bn(pg, x, kind, stride):
    g, b = pg.bn(x.shape[-1])
    # TODO(synk): the 3x3 pooling itself uses lax.reduce_window (XLA); only its BN
    # runs as a Pallas kernel.
    return batch_norm(_pool3x3(x, kind, stride), g, b)


# ----------------------------------------------------------------------------
# Deterministic parameter generation
# ----------------------------------------------------------------------------
class ParamGen:
    def __init__(self, seed=0):
        self.key = jax.random.PRNGKey(seed)
        self.count = 0

    def next_key(self):
        self.count += 1
        return jax.random.fold_in(self.key, self.count)

    def conv(self, cout, cin_g, kh, kw):
        fan = cin_g * kh * kw
        return jax.random.normal(self.next_key(), (cout, cin_g, kh, kw),
                                 jnp.float32) * (1.0 / np.sqrt(fan))

    def bn(self, c):
        return jnp.ones((c,), jnp.float32), jnp.zeros((c,), jnp.float32)

    def linear(self, cin, cout):
        w = jax.random.normal(self.next_key(), (cin, cout), jnp.float32) / np.sqrt(cin)
        b = jnp.zeros((cout,), jnp.float32)
        return w, b


# ----------------------------------------------------------------------------
# DARTS building blocks (Act=ReLU, Norm=BatchNorm, Conv2d pads k//2 per dim)
# ----------------------------------------------------------------------------
PRIMITIVES = ['none', 'max_pool_3x3', 'avg_pool_3x3', 'skip_connect',
              'sep_conv_3x3', 'sep_conv_5x5', 'dil_conv_3x3', 'dil_conv_5x5']


def relu_conv_bn(pg, x, c_out):
    w = pg.conv(c_out, x.shape[-1], 1, 1)
    g, b = pg.bn(c_out)
    return pointwise_conv(x, w, g, b, relu_in=True, fuse_bn=True)


def factorized_reduce(pg, x, c_out):
    c_in = x.shape[-1]
    c1 = c_out // 2
    w1 = pg.conv(c1, c_in, 1, 1)
    w2 = pg.conv(c_out - c1, c_in, 1, 1)
    g, b = pg.bn(c_out)
    # BN(concat) == per-half BN: stats are per-channel and halves share no channels,
    # so the BN is fused directly into each 1x1 conv epilogue.
    y1 = pointwise_conv(x[:, ::2, ::2, :], w1, g[:c1], b[:c1],
                        relu_in=True, fuse_bn=True)
    y2 = pointwise_conv(x[:, 1::2, 1::2, :], w2, g[c1:], b[c1:],
                        relu_in=True, fuse_bn=True)
    return jnp.concatenate([y1, y2], axis=-1)


def sep_conv(pg, x, c, k):
    # (ReLU, dw-conv kxk, pw-conv 1x1, BN) x 2 ; stride is 1 for every normal-cell edge.
    for _ in range(2):
        w_dw = pg.conv(c, 1, k, k)
        w_pw = pg.conv(c, c, 1, 1)
        g, b = pg.bn(c)
        y = depthwise_conv(x, w_dw, k=k, dil=1, relu_in=True)
        x = pointwise_conv(y, w_pw, g, b, fuse_bn=True)
    return x


def dil_conv(pg, x, c, k):
    w_dw = pg.conv(c, 1, k, k)
    w_pw = pg.conv(c, c, 1, 1)
    g, b = pg.bn(c)
    y = depthwise_conv(x, w_dw, k=k, dil=2, relu_in=True)
    return pointwise_conv(y, w_pw, g, b, fuse_bn=True)


def apply_primitive(pg, idx, x, c):
    name = PRIMITIVES[idx]                       # stride == 1 inside normal cells
    if name == 'none':
        return None                              # contributes exactly zero
    if name == 'max_pool_3x3':
        return pool_bn(pg, x, "max", 1)
    if name == 'avg_pool_3x3':
        return pool_bn(pg, x, "avg", 1)
    if name == 'skip_connect':
        return x
    if name == 'sep_conv_3x3':
        return sep_conv(pg, x, c, 3)
    if name == 'sep_conv_5x5':
        return sep_conv(pg, x, c, 5)
    if name == 'dil_conv_3x3':
        return dil_conv(pg, x, c, 3)
    if name == 'dil_conv_5x5':
        return dil_conv(pg, x, c, 5)
    raise ValueError(name)


# ----------------------------------------------------------------------------
# Cells
# ----------------------------------------------------------------------------
def normal_cell(pg, s0, s1, indices, c, steps, multiplier, reduction_prev):
    s0 = factorized_reduce(pg, s0, c) if reduction_prev else relu_conv_bn(pg, s0, c)
    s1 = relu_conv_bn(pg, s1, c)
    states = [s0, s1]
    offset = 0
    for _ in range(steps):
        acc = None
        for j, h in enumerate(states):
            idx = int(indices[offset + j])
            # Straight-through hardwts weight is exactly 1.0 at the argmax index,
            # so the per-edge scalar multiply is dropped (perf feedback).
            y = apply_primitive(pg, idx, h, c)
            if y is not None:
                acc = y if acc is None else acc + y
        if acc is None:                          # every incoming edge was 'none'
            acc = jnp.zeros_like(states[0])
        offset += len(states)
        states.append(acc)
    return jnp.concatenate(states[-multiplier:], axis=-1)


def _reduction_branch_conv(pg, x, c):
    # Act, Conv(1,3) s=(1,2) g=8, Conv(3,1) s=(2,1) g=8, Norm, Act, Conv 1x1, Norm
    w1 = pg.conv(c, c // 8, 1, 3)
    w2 = pg.conv(c, c // 8, 3, 1)
    g1, b1 = pg.bn(c)
    w3 = pg.conv(c, c, 1, 1)      # its bias cancels exactly under the following BN
    g2, b2 = pg.bn(c)
    y = conv_im2col(x, w1, stride=(1, 2), padding=(0, 1), groups=8, relu_in=True)
    y = conv_im2col(y, w2, g1, b1, stride=(2, 1), padding=(1, 0), groups=8,
                    fuse_bn=True)
    return pointwise_conv(y, w3, g2, b2, relu_in=True, fuse_bn=True)


def reduction_cell(pg, s0, s1, c):
    s0 = relu_conv_bn(pg, s0, c)
    s1 = relu_conv_bn(pg, s1, c)
    x0 = _reduction_branch_conv(pg, s0, c)
    x1 = pool_bn(pg, s1, "max", 2)
    x2 = _reduction_branch_conv(pg, s0, c)
    x3 = pool_bn(pg, s1, "max", 2)
    return jnp.concatenate([x0, x1, x2, x3], axis=-1)


# ----------------------------------------------------------------------------
# Network
# ----------------------------------------------------------------------------
def gumbel_sample(alphas, tau):
    # TODO(synk): tau is None at construction in the reference; interpreted as a
    # deterministic straight-through argmax (hardwts numerically one-hot, no noise).
    probs = jax.nn.softmax(alphas, axis=-1)
    indices = jnp.argmax(probs, axis=-1)
    one_hot = jax.nn.one_hot(indices, alphas.shape[-1], dtype=alphas.dtype)
    hardwts = one_hot - lax.stop_gradient(probs) + probs
    return hardwts, indices


def network_forward(x, *, C=4, layers=5, steps=4, multiplier=4, stem_multiplier=3,
                    num_classes=10, seed=0):
    pg = ParamGen(seed)

    k = sum(2 + i for i in range(steps))
    alphas = 0.001 * jax.random.normal(pg.next_key(), (k, len(PRIMITIVES)),
                                       jnp.float32)
    _, indices = gumbel_sample(alphas, None)
    indices = np.asarray(jax.device_get(indices))

    # Single NCHW -> NHWC transpose at the boundary; bf16 activations from here on.
    x = jnp.transpose(x, (0, 2, 3, 1)).astype(jnp.bfloat16)

    # stem: Conv2d(3, 3*C, 3, bias=False, pad=1) + Norm  (BN fused into the matmul)
    c_curr = stem_multiplier * C
    w_stem = pg.conv(c_curr, 3, 3, 3)
    g_stem, b_stem = pg.bn(c_curr)
    s = conv_im2col(x, w_stem, g_stem, b_stem, stride=(1, 1), padding=(1, 1),
                    fuse_bn=True)
    s0 = s1 = s

    c_p, c_curr = c_curr, C
    reduction_prev = False
    for i in range(layers):
        if i in [layers // 3, 2 * layers // 3]:
            c_curr *= 2
            reduction = True
        else:
            reduction = False
        if reduction:
            out = reduction_cell(pg, s0, s1, c_curr)
        else:
            out = normal_cell(pg, s0, s1, indices, c_curr, steps, multiplier,
                              reduction_prev)
        reduction_prev = reduction
        s0, s1 = s1, out
        c_p = multiplier * c_curr

    w_cls, b_cls = pg.linear(c_p, num_classes)
    return head_forward(s1, w_cls, b_cls)


if __name__ == "__main__":
    key = jax.random.PRNGKey(0)
    x = jax.random.normal(key, (2, 3, 16, 16), jnp.float32)   # NCHW, 3-channel image
    logits = network_forward(x)
    logits = jax.block_until_ready(logits)
    assert logits.shape == (2, 10)
    assert bool(jnp.all(jnp.isfinite(logits)))
    print("KERNEL_OK")
</pallas_src>

<mosaic_0001>
module attributes {stable_mosaic.version = 11 : i64} {
  func.func @_mm_kernel(%arg0: memref<512x27xbf16, #tpu.memory_space<vmem>>, %arg1: memref<27x12xbf16, #tpu.memory_space<vmem>>, %arg2: memref<1x12xf32, #tpu.memory_space<vmem>>, %arg3: memref<1x12xf32, #tpu.memory_space<vmem>>, %arg4: memref<512x12xbf16, #tpu.memory_space<vmem>>) attributes {dimension_semantics = [], scalar_prefetch = 0 : i64, scratch_operands = 0 : i64, tpu.core_type = #tpu.core_type<tc>} {
    %c0 = arith.constant 0 : index
    %c0_0 = arith.constant 0 : index
    %0 = vector.load %arg0[%c0, %c0_0] : memref<512x27xbf16, #tpu.memory_space<vmem>>, vector<512x27xbf16>
    %c0_1 = arith.constant 0 : index
    %c0_2 = arith.constant 0 : index
    %1 = vector.load %arg1[%c0_1, %c0_2] : memref<27x12xbf16, #tpu.memory_space<vmem>>, vector<27x12xbf16>
    %cst = arith.constant dense<0.000000e+00> : vector<512x12xf32>
    %2 = tpu.matmul %0, %1, %cst {dimension_numbers = #tpu.dot_dimension_numbers<[1], [0], [0], [1], [0, 0, 1, 1], [], []>} : vector<512x27xbf16>, vector<27x12xbf16>, vector<512x12xf32> -> vector<512x12xf32>
    %cst_3 = arith.constant dense<0.000000e+00> : vector<12xf32>
    %3 = vector.multi_reduction <add>, %2, %cst_3 [0] : vector<512x12xf32> to vector<12xf32>
    %4 = vector.shape_cast %3 : vector<12xf32> to vector<1x12xf32>
    %cst_4 = arith.constant 5.120000e+02 : f32
    %5 = vector.broadcast %cst_4 : f32 to vector<1x12xf32>
    %6 = arith.divf %4, %5 : vector<1x12xf32>
    %7 = vector.broadcast %6 : vector<1x12xf32> to vector<512x12xf32>
    %8 = arith.subf %2, %7 : vector<512x12xf32>
    %9 = arith.mulf %8, %8 : vector<512x12xf32>
    %cst_5 = arith.constant dense<0.000000e+00> : vector<12xf32>
    %10 = vector.multi_reduction <add>, %9, %cst_5 [0] : vector<512x12xf32> to vector<12xf32>
    %11 = vector.shape_cast %10 : vector<12xf32> to vector<1x12xf32>
    %cst_6 = arith.constant 5.120000e+02 : f32
    %12 = vector.broadcast %cst_6 : f32 to vector<1x12xf32>
    %13 = arith.divf %11, %12 : vector<1x12xf32>
    %cst_7 = arith.constant 9.99999974E-6 : f32
    %14 = vector.broadcast %cst_7 : f32 to vector<1x12xf32>
    %15 = arith.addf %13, %14 : vector<1x12xf32>
    %16 = math.rsqrt %15 : vector<1x12xf32>
    %17 = vector.broadcast %16 : vector<1x12xf32> to vector<512x12xf32>
    %18 = arith.mulf %8, %17 : vector<512x12xf32>
    %c0_8 = arith.constant 0 : index
    %c0_9 = arith.constant 0 : index
    %19 = vector.load %arg2[%c0_8, %c0_9] : memref<1x12xf32, #tpu.memory_space<vmem>>, vector<1x12xf32>
    %20 = vector.broadcast %19 : vector<1x12xf32> to vector<512x12xf32>
    %21 = arith.mulf %18, %20 : vector<512x12xf32>
    %c0_10 = arith.constant 0 : index
    %c0_11 = arith.constant 0 : index
    %22 = vector.load %arg3[%c0_10, %c0_11] : memref<1x12xf32, #tpu.memory_space<vmem>>, vector<1x12xf32>
    %23 = vector.broadcast %22 : vector<1x12xf32> to vector<512x12xf32>
    %24 = arith.addf %21, %23 : vector<512x12xf32>
    %25 = arith.truncf %24 : vector<512x12xf32> to vector<512x12xbf16>
    %c0_12 = arith.constant 0 : index
    %c0_13 = arith.constant 0 : index
    %26 = vector.load %arg4[%c0_12, %c0_13] : memref<512x12xbf16, #tpu.memory_space<vmem>>, vector<512x12xbf16>
    tpu.vector_store %arg4[%c0_12, %c0_13], %25 {strides = array<i32>} : memref<512x12xbf16, #tpu.memory_space<vmem>>, vector<512x12xbf16>,
    return
  }
}

</mosaic_0001>

<llo_original>
// kernel: fused_matmul.1
$region0: #{fused_matmul.1}
  #allocation0 [shape = 'u32[]', space=smem, size = 0x4, offset = 0x4, fixed_abs, tag = 'smem constant byte address 0x4 - core index']
  #allocation1 [shape = 'u32[144,128]{1,0:T(1,128)}', space=vmem, size = 0x12000, scoped, tag = 'internal scratch']
  %s0 = inlined_call_operand.vmem [shape: bf16[512,27], index: 0, kind: input, shape index: {}]
  %s1 = inlined_call_operand.vmem [shape: bf16[27,12], index: 1, kind: input, shape index: {}]
  %s2 = inlined_call_operand.vmem [shape: f32[1,12], index: 2, kind: input, shape index: {}]
  %s3 = inlined_call_operand.vmem [shape: f32[1,12], index: 3, kind: input, shape index: {}]
  %s4 = inlined_call_operand.vmem [shape: bf16[512,12], index: 4, kind: output, shape index: {}]
  %s5 = sld [smem:[#allocation0]]
  $region26: #{fused_matmul.1} parent=0
    _
  %s7 = ssub.s32 1, %s5
  %s8 = scalar_select 0, %s7, %s5
  // Predicated region
  $region2: #{fused_matmul.1} parent=0 // pred_check
    _
  $region3: #{fused_matmul.1} parent=0 // pred_check_branch
    %10 = sbr.rel (0) target = $region5
  $region4: #{fused_matmul.1} parent=0 // pred_region
    _
  $region5: #{fused_matmul.1} parent=0 // pred_fallthru
    _
  // Predicated region
  $region6: #{fused_matmul.1} parent=0 // pred_check
    _
  $region7: #{fused_matmul.1} parent=0 // pred_check_branch
    %12 = sbr.rel (0) target = $region9
  $region8: #{fused_matmul.1} parent=0 // pred_region
    _
  $region9: #{fused_matmul.1} parent=0 // pred_fallthru
    _
  // Predicated region
  $region10: #{fused_matmul.1} parent=0 // pred_check
    _
  $region11: #{fused_matmul.1} parent=0 // pred_check_branch
    %14 = sbr.rel (0) target = $region13
  $region12: #{fused_matmul.1} parent=0 // pred_region
    _
  $region13: #{fused_matmul.1} parent=0 // pred_fallthru
    _
  // Predicated region
  $region14: #{fused_matmul.1} parent=0 // pred_check
    _
  $region15: #{fused_matmul.1} parent=0 // pred_check_branch
    %16 = sbr.rel (0) target = $region17
  $region16: #{fused_matmul.1} parent=0 // pred_region
    _
  $region17: #{fused_matmul.1} parent=0 // pred_fallthru
    _
  %v18 = vld [vmem:[%s0] sm:$0xf]
  %v19 = vld [vmem:[%s0 + $0x4] sm:$0xf]
  %v20 = vld [vmem:[%s0 + $0x8] sm:$0xf]
  %v21 = vld [vmem:[%s0 + $0xc] sm:$0xf]
  %v22 = vld [vmem:[%s0 + $0x10] sm:$0xf]
  %v23 = vld [vmem:[%s0 + $0x14] sm:$0xf]
  %v24 = vld [vmem:[%s0 + $0x18] sm:$0xf]
  %v25 = vld [vmem:[%s0 + $0x1c] sm:$0xf]
  %v26 = vld [vmem:[%s0 + $0x20] sm:$0xf]
  %v27 = vld [vmem:[%s0 + $0x24] sm:$0xf]
  %v28 = vld [vmem:[%s0 + $0x28] sm:$0xf]
  %v29 = vld [vmem:[%s0 + $0x2c] sm:$0xf]
  %v30 = vld [vmem:[%s0 + $0x30] sm:$0xf]
  %v31 = vld [vmem:[%s0 + $0x34] sm:$0xf]
  %v32 = vld [vmem:[%s0 + $0x38] sm:$0xf]
  %v33 = vld [vmem:[%s0 + $0x3c] sm:$0xf]
  %v34 = vld [vmem:[%s0 + $0x40] sm:$0xf]
  %v35 = vld [vmem:[%s0 + $0x44] sm:$0xf]
  %v36 = vld [vmem:[%s0 + $0x48] sm:$0xf]
  %v37 = vld [vmem:[%s0 + $0x4c] sm:$0xf]
  %v38 = vld [vmem:[%s0 + $0x50] sm:$0xf]
  %v39 = vld [vmem:[%s0 + $0x54] sm:$0xf]
  %v40 = vld [vmem:[%s0 + $0x58] sm:$0xf]
  %v41 = vld [vmem:[%s0 + $0x5c] sm:$0xf]
  %v42 = vld [vmem:[%s0 + $0x60] sm:$0xf]
  %v43 = vld [vmem:[%s0 + $0x64] sm:$0xf]
  %v44 = vld [vmem:[%s0 + $0x68] sm:$0xf]
  %v45 = vld [vmem:[%s0 + $0x6c] sm:$0xf]
  %v46 = vld [vmem:[%s0 + $0x70] sm:$0xf]
  %v47 = vld [vmem:[%s0 + $0x74] sm:$0xf]
  %v48 = vld [vmem:[%s0 + $0x78] sm:$0xf]
  %v49 = vld [vmem:[%s0 + $0x7c] sm:$0xf]
  %v50 = vld [vmem:[%s0 + $0x80] sm:$0xf]
  %v51 = vld [vmem:[%s0 + $0x84] sm:$0xf]
  %v52 = vld [vmem:[%s0 + $0x88] sm:$0xf]
  %v53 = vld [vmem:[%s0 + $0x8c] sm:$0xf]
  %v54 = vld [vmem:[%s0 + $0x90] sm:$0xf]
  %v55 = vld [vmem:[%s0 + $0x94] sm:$0xf]
  %v56 = vld [vmem:[%s0 + $0x98] sm:$0xf]
  %v57 = vld [vmem:[%s0 + $0x9c] sm:$0xf]
  %v58 = vld [vmem:[%s0 + $0xa0] sm:$0xf]
  %v59 = vld [vmem:[%s0 + $0xa4] sm:$0xf]
  %v60 = vld [vmem:[%s0 + $0xa8] sm:$0xf]
  %v61 = vld [vmem:[%s0 + $0xac] sm:$0xf]
  %v62 = vld [vmem:[%s0 + $0xb0] sm:$0xf]
  %v63 = vld [vmem:[%s0 + $0xb4] sm:$0xf]
  %v64 = vld [vmem:[%s0 + $0xb8] sm:$0xf]
  %v65 = vld [vmem:[%s0 + $0xbc] sm:$0xf]
  %v66 = vld [vmem:[%s0 + $0xc0] sm:$0xf]
  %v67 = vld [vmem:[%s0 + $0xc4] sm:$0xf]
  %v68 = vld [vmem:[%s0 + $0xc8] sm:$0xf]
  %v69 = vld [vmem:[%s0 + $0xcc] sm:$0xf]
  %v70 = vld [vmem:[%s0 + $0xd0] sm:$0xf]
  %v71 = vld [vmem:[%s0 + $0xd4] sm:$0xf]
  %v72 = vld [vmem:[%s0 + $0xd8] sm:$0xf]
  %v73 = vld [vmem:[%s0 + $0xdc] sm:$0xf]
  %v74 = vld [vmem:[%s0 + $0xe0] sm:$0xf]
  %v75 = vld [vmem:[%s0 + $0xe4] sm:$0xf]
  %v76 = vld [vmem:[%s0 + $0xe8] sm:$0xf]
  %v77 = vld [vmem:[%s0 + $0xec] sm:$0xf]
  %v78 = vld [vmem:[%s0 + $0xf0] sm:$0xf]
  %v79 = vld [vmem:[%s0 + $0xf4] sm:$0xf]
  %v80 = vld [vmem:[%s0 + $0xf8] sm:$0xf]
  %v81 = vld [vmem:[%s0 + $0xfc] sm:$0xf]
  %v82 = vld [vmem:[%s1] sm:$0xf]
  %v83 = vld [vmem:[%s1 + $0x4] sm:$0xf]
  %v84 = vld [vmem:[%s1 + $0x8] sm:$0xf]
  %v85 = vld [vmem:[%s1 + $0xc] sm:$0x3]
  %v150 = vunpack.c.l.b16 %v18
  %v151 = vunpack.c.l.b16 %v19
  %v152 = vunpack.c.l.b16 %v20
  %v153 = vunpack.c.l.b16 %v21
  %v154 = vunpack.c.l.b16 %v22
  %v155 = vunpack.c.l.b16 %v23
  %v156 = vunpack.c.l.b16 %v24
  %v157 = vunpack.c.l.b16 %v25
  %v158 = vunpack.c.l.b16 %v26
  %v159 = vunpack.c.l.b16 %v27
  %v160 = vunpack.c.l.b16 %v28
  %v161 = vunpack.c.l.b16 %v29
  %v162 = vunpack.c.l.b16 %v30
  %v163 = vunpack.c.l.b16 %v31
  %v164 = vunpack.c.l.b16 %v32
  %v165 = vunpack.c.l.b16 %v33
  %v166 = vunpack.c.l.b16 %v34
  %v167 = vunpack.c.l.b16 %v35
  %v168 = vunpack.c.l.b16 %v36
  %v169 = vunpack.c.l.b16 %v37
  %v170 = vunpack.c.l.b16 %v38
  %v171 = vunpack.c.l.b16 %v39
  %v172 = vunpack.c.l.b16 %v40
  %v173 = vunpack.c.l.b16 %v41
  %v174 = vunpack.c.l.b16 %v42
  %v175 = vunpack.c.l.b16 %v43
  %v176 = vunpack.c.l.b16 %v44
  %v177 = vunpack.c.l.b16 %v45
  %v178 = vunpack.c.l.b16 %v46
  %v179 = vunpack.c.l.b16 %v47
  %v180 = vunpack.c.l.b16 %v48
  %v181 = vunpack.c.l.b16 %v49
  %v182 = vunpack.c.l.b16 %v50
  %v183 = vunpack.c.l.b16 %v51
  %v184 = vunpack.c.l.b16 %v52
  %v185 = vunpack.c.l.b16 %v53
  %v186 = vunpack.c.l.b16 %v54
  %v187 = vunpack.c.l.b16 %v55
  %v188 = vunpack.c.l.b16 %v56
  %v189 = vunpack.c.l.b16 %v57
  %v190 = vunpack.c.l.b16 %v58
  %v191 = vunpack.c.l.b16 %v59
  %v192 = vunpack.c.l.b16 %v60
  %v193 = vunpack.c.l.b16 %v61
  %v194 = vunpack.c.l.b16 %v62
  %v195 = vunpack.c.l.b16 %v63
  %v196 = vunpack.c.l.b16 %v64
  %v197 = vunpack.c.l.b16 %v65
  %v198 = vunpack.c.l.b16 %v66
  %v199 = vunpack.c.l.b16 %v67
  %v200 = vunpack.c.l.b16 %v68
  %v201 = vunpack.c.l.b16 %v69
  %v202 = vunpack.c.l.b16 %v70
  %v203 = vunpack.c.l.b16 %v71
  %v204 = vunpack.c.l.b16 %v72
  %v205 = vunpack.c.l.b16 %v73
  %v206 = vunpack.c.l.b16 %v74
  %v207 = vunpack.c.l.b16 %v75
  %v208 = vunpack.c.l.b16 %v76
  %v209 = vunpack.c.l.b16 %v77
  %v210 = vunpack.c.l.b16 %v78
  %v211 = vunpack.c.l.b16 %v79
  %v212 = vunpack.c.l.b16 %v80
  %v213 = vunpack.c.l.b16 %v81
  %v214 = vpack.c.b16 %v151, %v150
  %v215 = vpack.c.b16 %v153, %v152
  %v216 = vpack.c.b16 %v155, %v154
  %v217 = vpack.c.b16 %v157, %v156
  %v218 = vpack.c.b16 %v159, %v158
  %v219 = vpack.c.b16 %v161, %v160
  %v220 = vpack.c.b16 %v163, %v162
  %v221 = vpack.c.b16 %v165, %v164
  %v222 = vpack.c.b16 %v167, %v166
  %v223 = vpack.c.b16 %v169, %v168
  %v224 = vpack.c.b16 %v171, %v170
  %v225 = vpack.c.b16 %v173, %v172
  %v226 = vpack.c.b16 %v175, %v174
  %v227 = vpack.c.b16 %v177, %v176
  %v228 = vpack.c.b16 %v179, %v178
  %v229 = vpack.c.b16 %v181, %v180
  %v230 = vpack.c.b16 %v183, %v182
  %v231 = vpack.c.b16 %v185, %v184
  %v232 = vpack.c.b16 %v187, %v186
  %v233 = vpack.c.b16 %v189, %v188
  %v234 = vpack.c.b16 %v191, %v190
  %v235 = vpack.c.b16 %v193, %v192
  %v236 = vpack.c.b16 %v195, %v194
  %v237 = vpack.c.b16 %v197, %v196
  %v238 = vpack.c.b16 %v199, %v198
  %v239 = vpack.c.b16 %v201, %v200
  %v240 = vpack.c.b16 %v203, %v202
  %v241 = vpack.c.b16 %v205, %v204
  %v242 = vpack.c.b16 %v207, %v206
  %v243 = vpack.c.b16 %v209, %v208
  %v244 = vpack.c.b16 %v211, %v210
  %v245 = vpack.c.b16 %v213, %v212
  %v250 = vunpack.c.l.b16 %v82
  %v251 = vunpack.c.l.b16 %v83
  %v252 = vunpack.c.l.b16 %v84
  %v253 = vunpack.c.l.b16 %v85
  %v254 = vpack.c.b16 %v251, %v250
  %v255 = vpack.c.b16 %v253, %v252
  %vm257 = vcmask 220160
  %v259 = vsel %vm257, %v214, 0
  %v262 = vsel %vm257, %v215, 0
  %v265 = vsel %vm257, %v216, 0
  %v268 = vsel %vm257, %v217, 0
  %v271 = vsel %vm257, %v218, 0
  %v274 = vsel %vm257, %v219, 0
  %v277 = vsel %vm257, %v220, 0
  %v280 = vsel %vm257, %v221, 0
  %v283 = vsel %vm257, %v222, 0
  %v286 = vsel %vm257, %v223, 0
  %v289 = vsel %vm257, %v224, 0
  %v292 = vsel %vm257, %v225, 0
  %v295 = vsel %vm257, %v226, 0
  %v298 = vsel %vm257, %v227, 0
  %v301 = vsel %vm257, %v228, 0
  %v304 = vsel %vm257, %v229, 0
  %v307 = vsel %vm257, %v230, 0
  %v310 = vsel %vm257, %v231, 0
  %v313 = vsel %vm257, %v232, 0
  %v316 = vsel %vm257, %v233, 0
  %v319 = vsel %vm257, %v234, 0
  %v322 = vsel %vm257, %v235, 0
  %v325 = vsel %vm257, %v236, 0
  %v328 = vsel %vm257, %v237, 0
  %v331 = vsel %vm257, %v238, 0
  %v334 = vsel %vm257, %v239, 0
  %v337 = vsel %vm257, %v240, 0
  %v340 = vsel %vm257, %v241, 0
  %v343 = vsel %vm257, %v242, 0
  %v346 = vsel %vm257, %v243, 0
  %v349 = vsel %vm257, %v244, 0
  %v352 = vsel %vm257, %v245, 0
  %vm354 = vcmask 1044480
  %vm355 = vcmask 1045504
  %v356 = vsel %vm354, 4294967295, 65535
  %v357 = vsel %vm355, %v356, 0
  %v359 = vand.u32 %v255, %v357
  %361 = vmatprep.subr.bf16.mxu0 0
  %362 = vmatpush1.bf16.msra.mxu0 0
  %363 = vmatprep.subr.bf16.mxu0 0
  %364 = vmatpush1.bf16.msra.mxu0 0
  %365 = vmatprep.subr.bf16.mxu0 0
  %366 = vmatpush1.bf16.msra.mxu0 0
  %367 = vmatprep.subr.bf16.mxu0 0
  %368 = vmatpush1.bf16.msra.mxu0 0
  %369 = vmatprep.subr.bf16.mxu0 0
  %370 = vmatpush1.bf16.msra.mxu0 0
  %371 = vmatprep.subr.bf16.mxu0 0
  %372 = vmatpush1.bf16.msra.mxu0 0
  %373 = vmatprep.subr.bf16.mxu0 0
  %374 = vmatpush1.bf16.msra.mxu0 %v359
  %375 = vmatprep.subr.bf16.mxu0 0
  %376 = vmatpush1.bf16.msra.mxu0 %v254
  %377 = vmatprep.subr.bf16.mxu0 0
  %378 = vmatpush2.bf16.msra.mxu0 0
  %379 = vmatprep.subr.bf16.mxu0 0
  %380 = vmatpush2.bf16.msra.mxu0 0
  %381 = vmatprep.subr.bf16.mxu0 0
  %382 = vmatpush2.bf16.msra.mxu0 0
  %383 = vmatprep.subr.bf16.mxu0 0
  %384 = vmatpush2.bf16.msra.mxu0 0
  %385 = vmatprep.subr.bf16.mxu0 0
  %386 = vmatpush2.bf16.msra.mxu0 0
  %387 = vmatprep.subr.bf16.mxu0 0
  %388 = vmatpush2.bf16.msra.mxu0 0
  %389 = vmatprep.subr.bf16.mxu0 0
  %390 = vmatpush2.bf16.msra.mxu0 0
  %391 = vmatprep.subr.bf16.mxu0 0
  %392 = vmatpush2.bf16.msra.mxu0 0
  %393 = vmatprep.mubr.bf16.mxu0 0
  %394 = vmatmul.mubr.bf16.gmra.mxu0 %v259
  %v395 = vpop.f32.mrf.mxu0
  %v396 = vadd.f32 0.0, %v395
  %v397 = vpop.f32.mrf.mxu0
  %v398 = vpop.f32.mrf.mxu0
  %v399 = vadd.f32 0.0, %v398
  %v400 = vpop.f32.mrf.mxu0
  %401 = vmatprep.mubr.bf16.mxu0 0
  %402 = vmatmul.mubr.bf16.gmra.mxu0 %v262
  %v403 = vpop.f32.mrf.mxu0
  %v404 = vadd.f32 0.0, %v403
  %v405 = vpop.f32.mrf.mxu0
  %v406 = vpop.f32.mrf.mxu0
  %v407 = vadd.f32 0.0, %v406
  %v408 = vpop.f32.mrf.mxu0
  %409 = vmatprep.mubr.bf16.mxu0 0
  %410 = vmatmul.mubr.bf16.gmra.mxu0 %v265
  %v411 = vpop.f32.mrf.mxu0
  %v412 = vadd.f32 0.0, %v411
  %v413 = vpop.f32.mrf.mxu0
  %v414 = vpop.f32.mrf.mxu0
  %v415 = vadd.f32 0.0, %v414
  %v416 = vpop.f32.mrf.mxu0
  %417 = vmatprep.mubr.bf16.mxu0 0
  %418 = vmatmul.mubr.bf16.gmra.mxu0 %v268
  %v419 = vpop.f32.mrf.mxu0
  %v420 = vadd.f32 0.0, %v419
  %v421 = vpop.f32.mrf.mxu0
  %v422 = vpop.f32.mrf.mxu0
  %v423 = vadd.f32 0.0, %v422
  %v424 = vpop.f32.mrf.mxu0
  %425 = vmatprep.mubr.bf16.mxu0 0
  %426 = vmatmul.mubr.bf16.gmra.mxu0 %v271
  %v427 = vpop.f32.mrf.mxu0
  %v428 = vadd.f32 0.0, %v427
  %v429 = vpop.f32.mrf.mxu0
  %v430 = vpop.f32.mrf.mxu0
  %v431 = vadd.f32 0.0, %v430
  %v432 = vpop.f32.mrf.mxu0
  %433 = vmatprep.mubr.bf16.mxu0 0
  %434 = vmatmul.mubr.bf16.gmra.mxu0 %v274
  %v435 = vpop.f32.mrf.mxu0
  %v436 = vadd.f32 0.0, %v435
  %v437 = vpop.f32.mrf.mxu0
  %v438 = vpop.f32.mrf.mxu0
  %v439 = vadd.f32 0.0, %v438
  %v440 = vpop.f32.mrf.mxu0
  %441 = vmatprep.mubr.bf16.mxu0 0
  %442 = vmatmul.mubr.bf16.gmra.mxu0 %v277
  %v443 = vpop.f32.mrf.mxu0
  %v444 = vadd.f32 0.0, %v443
  %v445 = vpop.f32.mrf.mxu0
  %v446 = vpop.f32.mrf.mxu0
  %v447 = vadd.f32 0.0, %v446
  %v448 = vpop.f32.mrf.mxu0
  %449 = vmatprep.mubr.bf16.mxu0 0
  %450 = vmatmul.mubr.bf16.gmra.mxu0 %v280
  %v451 = vpop.f32.mrf.mxu0
  %v452 = vadd.f32 0.0, %v451
  %v453 = vpop.f32.mrf.mxu0
  %v454 = vpop.f32.mrf.mxu0
  %v455 = vadd.f32 0.0, %v454
  %v456 = vpop.f32.mrf.mxu0
  %457 = vmatprep.mubr.bf16.mxu0 0
  %458 = vmatmul.mubr.bf16.gmra.mxu0 %v283
  %v459 = vpop.f32.mrf.mxu0
  %v460 = vadd.f32 0.0, %v459
  %v461 = vpop.f32.mrf.mxu0
  %v462 = vpop.f32.mrf.mxu0
  %v463 = vadd.f32 0.0, %v462
  %v464 = vpop.f32.mrf.mxu0
  %465 = vmatprep.mubr.bf16.mxu0 0
  %466 = vmatmul.mubr.bf16.gmra.mxu0 %v286
  %v467 = vpop.f32.mrf.mxu0
  %v468 = vadd.f32 0.0, %v467
  %v469 = vpop.f32.mrf.mxu0
  %v470 = vpop.f32.mrf.mxu0
  %v471 = vadd.f32 0.0, %v470
  %v472 = vpop.f32.mrf.mxu0
  %473 = vmatprep.mubr.bf16.mxu0 0
  %474 = vmatmul.mubr.bf16.gmra.mxu0 %v289
  %v475 = vpop.f32.mrf.mxu0
  %v476 = vadd.f32 0.0, %v475
  %v477 = vpop.f32.mrf.mxu0
  %v478 = vpop.f32.mrf.mxu0
  %v479 = vadd.f32 0.0, %v478
  %v480 = vpop.f32.mrf.mxu0
  %481 = vmatprep.mubr.bf16.mxu0 0
  %482 = vmatmul.mubr.bf16.gmra.mxu0 %v292
  %v483 = vpop.f32.mrf.mxu0
  %v484 = vadd.f32 0.0, %v483
  %v485 = vpop.f32.mrf.mxu0
  %v486 = vpop.f32.mrf.mxu0
  %v487 = vadd.f32 0.0, %v486
  %v488 = vpop.f32.mrf.mxu0
  %489 = vmatprep.mubr.bf16.mxu0 0
  %490 = vmatmul.mubr.bf16.gmra.mxu0 %v295
  %v491 = vpop.f32.mrf.mxu0
  %v492 = vadd.f32 0.0, %v491
  %v493 = vpop.f32.mrf.mxu0
  %v494 = vpop.f32.mrf.mxu0
  %v495 = vadd.f32 0.0, %v494
  %v496 = vpop.f32.mrf.mxu0
  %497 = vmatprep.mubr.bf16.mxu0 0
  %498 = vmatmul.mubr.bf16.gmra.mxu0 %v298
  %v499 = vpop.f32.mrf.mxu0
  %v500 = vadd.f32 0.0, %v499
  %v501 = vpop.f32.mrf.mxu0
  %v502 = vpop.f32.mrf.mxu0
  %v503 = vadd.f32 0.0, %v502
  %v504 = vpop.f32.mrf.mxu0
  %505 = vmatprep.mubr.bf16.mxu0 0
  %506 = vmatmul.mubr.bf16.gmra.mxu0 %v301
  %v507 = vpop.f32.mrf.mxu0
  %v508 = vadd.f32 0.0, %v507
  %v509 = vpop.f32.mrf.mxu0
  %v510 = vpop.f32.mrf.mxu0
  %v511 = vadd.f32 0.0, %v510
  %v512 = vpop.f32.mrf.mxu0
  %513 = vmatprep.mubr.bf16.mxu0 0
  %514 = vmatmul.mubr.bf16.gmra.mxu0 %v304
  %v515 = vpop.f32.mrf.mxu0
  %v516 = vadd.f32 0.0, %v515
  %v517 = vpop.f32.mrf.mxu0
  %v518 = vpop.f32.mrf.mxu0
  %v519 = vadd.f32 0.0, %v518
  %v520 = vpop.f32.mrf.mxu0
  %521 = vmatprep.mubr.bf16.mxu0 0
  %522 = vmatmul.mubr.bf16.gmra.mxu0 %v307
  %v523 = vpop.f32.mrf.mxu0
  %v524 = vadd.f32 0.0, %v523
  %v525 = vpop.f32.mrf.mxu0
  %v526 = vpop.f32.mrf.mxu0
  %v527 = vadd.f32 0.0, %v526
  %v528 = vpop.f32.mrf.mxu0
  %529 = vmatprep.mubr.bf16.mxu0 0
  %530 = vmatmul.mubr.bf16.gmra.mxu0 %v310
  %v531 = vpop.f32.mrf.mxu0
  %v532 = vadd.f32 0.0, %v531
  %v533 = vpop.f32.mrf.mxu0
  %v534 = vpop.f32.mrf.mxu0
  %v535 = vadd.f32 0.0, %v534
  %v536 = vpop.f32.mrf.mxu0
  %537 = vmatprep.mubr.bf16.mxu0 0
  %538 = vmatmul.mubr.bf16.gmra.mxu0 %v313
  %v539 = vpop.f32.mrf.mxu0
  %v540 = vadd.f32 0.0, %v539
  %v541 = vpop.f32.mrf.mxu0
  %v542 = vpop.f32.mrf.mxu0
  %v543 = vadd.f32 0.0, %v542
  %v544 = vpop.f32.mrf.mxu0
  %545 = vmatprep.mubr.bf16.mxu0 0
  %546 = vmatmul.mubr.bf16.gmra.mxu0 %v316
  %v547 = vpop.f32.mrf.mxu0
  %v548 = vadd.f32 0.0, %v547
  %v549 = vpop.f32.mrf.mxu0
  %v550 = vpop.f32.mrf.mxu0
  %v551 = vadd.f32 0.0, %v550
  %v552 = vpop.f32.mrf.mxu0
  %553 = vmatprep.mubr.bf16.mxu0 0
  %554 = vmatmul.mubr.bf16.gmra.mxu0 %v319
  %v555 = vpop.f32.mrf.mxu0
  %v556 = vadd.f32 0.0, %v555
  %v557 = vpop.f32.mrf.mxu0
  %v558 = vpop.f32.mrf.mxu0
  %v559 = vadd.f32 0.0, %v558
  %v560 = vpop.f32.mrf.mxu0
  %561 = vmatprep.mubr.bf16.mxu0 0
  %562 = vmatmul.mubr.bf16.gmra.mxu0 %v322
  %v563 = vpop.f32.mrf.mxu0
  %v564 = vadd.f32 0.0, %v563
  %v565 = vpop.f32.mrf.mxu0
  %v566 = vpop.f32.mrf.mxu0
  %v567 = vadd.f32 0.0, %v566
  %v568 = vpop.f32.mrf.mxu0
  %569 = vmatprep.mubr.bf16.mxu0 0
  %570 = vmatmul.mubr.bf16.gmra.mxu0 %v325
  %v571 = vpop.f32.mrf.mxu0
  %v572 = vadd.f32 0.0, %v571
  %v573 = vpop.f32.mrf.mxu0
  %v574 = vpop.f32.mrf.mxu0
  %v575 = vadd.f32 0.0, %v574
  %v576 = vpop.f32.mrf.mxu0
  %577 = vmatprep.mubr.bf16.mxu0 0
  %578 = vmatmul.mubr.bf16.gmra.mxu0 %v328
  %v579 = vpop.f32.mrf.mxu0
  %v580 = vadd.f32 0.0, %v579
  %v581 = vpop.f32.mrf.mxu0
  %v582 = vpop.f32.mrf.mxu0
  %v583 = vadd.f32 0.0, %v582
  %v584 = vpop.f32.mrf.mxu0
  %585 = vmatprep.mubr.bf16.mxu0 0
  %586 = vmatmul.mubr.bf16.gmra.mxu0 %v331
  %v587 = vpop.f32.mrf.mxu0
  %v588 = vadd.f32 0.0, %v587
  %v589 = vpop.f32.mrf.mxu0
  %v590 = vpop.f32.mrf.mxu0
  %v591 = vadd.f32 0.0, %v590
  %v592 = vpop.f32.mrf.mxu0
  %593 = vmatprep.mubr.bf16.mxu0 0
  %594 = vmatmul.mubr.bf16.gmra.mxu0 %v334
  %v595 = vpop.f32.mrf.mxu0
  %v596 = vadd.f32 0.0, %v595
  %v597 = vpop.f32.mrf.mxu0
  %v598 = vpop.f32.mrf.mxu0
  %v599 = vadd.f32 0.0, %v598
  %v600 = vpop.f32.mrf.mxu0
  %601 = vmatprep.mubr.bf16.mxu0 0
  %602 = vmatmul.mubr.bf16.gmra.mxu0 %v337
  %v603 = vpop.f32.mrf.mxu0
  %v604 = vadd.f32 0.0, %v603
  %v605 = vpop.f32.mrf.mxu0
  %v606 = vpop.f32.mrf.mxu0
  %v607 = vadd.f32 0.0, %v606
  %v608 = vpop.f32.mrf.mxu0
  %609 = vmatprep.mubr.bf16.mxu0 0
  %610 = vmatmul.mubr.bf16.gmra.mxu0 %v340
  %v611 = vpop.f32.mrf.mxu0
  %v612 = vadd.f32 0.0, %v611
  %v613 = vpop.f32.mrf.mxu0
  %v614 = vpop.f32.mrf.mxu0
  %v615 = vadd.f32 0.0, %v614
  %v616 = vpop.f32.mrf.mxu0
  %617 = vmatprep.mubr.bf16.mxu0 0
  %618 = vmatmul.mubr.bf16.gmra.mxu0 %v343
  %v619 = vpop.f32.mrf.mxu0
  %v620 = vadd.f32 0.0, %v619
  %v621 = vpop.f32.mrf.mxu0
  %v622 = vpop.f32.mrf.mxu0
  %v623 = vadd.f32 0.0, %v622
  %v624 = vpop.f32.mrf.mxu0
  %625 = vmatprep.mubr.bf16.mxu0 0
  %626 = vmatmul.mubr.bf16.gmra.mxu0 %v346
  %v627 = vpop.f32.mrf.mxu0
  %v628 = vadd.f32 0.0, %v627
  %v629 = vpop.f32.mrf.mxu0
  %v630 = vpop.f32.mrf.mxu0
  %v631 = vadd.f32 0.0, %v630
  %v632 = vpop.f32.mrf.mxu0
  %633 = vmatprep.mubr.bf16.mxu0 0
  %634 = vmatmul.mubr.bf16.gmra.mxu0 %v349
  %v635 = vpop.f32.mrf.mxu0
  %v636 = vadd.f32 0.0, %v635
  %v637 = vpop.f32.mrf.mxu0
  %v638 = vpop.f32.mrf.mxu0
  %v639 = vadd.f32 0.0, %v638
  %v640 = vpop.f32.mrf.mxu0
  %641 = vmatprep.mubr.bf16.mxu0 0
  %642 = vmatmul.mubr.bf16.gmra.mxu0 %v352
  %v643 = vpop.f32.mrf.mxu0
  %v644 = vadd.f32 0.0, %v643
  %v645 = vpop.f32.mrf.mxu0
  %v646 = vpop.f32.mrf.mxu0
  %v647 = vadd.f32 0.0, %v646
  %v648 = vpop.f32.mrf.mxu0
  %649 = vdwg.mxu0
  %vm650 = vcmask 97280
  %v651 = vsel %vm650, %v396, 0.0
  %v652 = vsel %vm650, %v399, 0.0
  %v653 = vadd.f32 %v651, %v652
  %v654 = vsel %vm650, %v404, 0.0
  %v655 = vadd.f32 %v653, %v654
  %v656 = vsel %vm650, %v407, 0.0
  %v657 = vadd.f32 %v655, %v656
  %v658 = vsel %vm650, %v412, 0.0
  %v659 = vadd.f32 %v657, %v658
  %v660 = vsel %vm650, %v415, 0.0
  %v661 = vadd.f32 %v659, %v660
  %v662 = vsel %vm650, %v420, 0.0
  %v663 = vadd.f32 %v661, %v662
  %v664 = vsel %vm650, %v423, 0.0
  %v665 = vadd.f32 %v663, %v664
  %v666 = vsel %vm650, %v428, 0.0
  %v667 = vadd.f32 %v665, %v666
  %v668 = vsel %vm650, %v431, 0.0
  %v669 = vadd.f32 %v667, %v668
  %v670 = vsel %vm650, %v436, 0.0
  %v671 = vadd.f32 %v669, %v670
  %v672 = vsel %vm650, %v439, 0.0
  %v673 = vadd.f32 %v671, %v672
  %v674 = vsel %vm650, %v444, 0.0
  %v675 = vadd.f32 %v673, %v674
  %v676 = vsel %vm650, %v447, 0.0
  %v677 = vadd.f32 %v675, %v676
  %v678 = vsel %vm650, %v452, 0.0
  %v679 = vadd.f32 %v677, %v678
  %v680 = vsel %vm650, %v455, 0.0
  %v681 = vadd.f32 %v679, %v680
  %v682 = vsel %vm650, %v460, 0.0
  %v683 = vadd.f32 %v681, %v682
  %v684 = vsel %vm650, %v463, 0.0
  %v685 = vadd.f32 %v683, %v684
  %v686 = vsel %vm650, %v468, 0.0
  %v687 = vadd.f32 %v685, %v686
  %v688 = vsel %vm650, %v471, 0.0
  %v689 = vadd.f32 %v687, %v688
  %v690 = vsel %vm650, %v476, 0.0
  %v691 = vadd.f32 %v689, %v690
  %v692 = vsel %vm650, %v479, 0.0
  %v693 = vadd.f32 %v691, %v692
  %v694 = vsel %vm650, %v484, 0.0
  %v695 = vadd.f32 %v693, %v694
  %v696 = vsel %vm650, %v487, 0.0
  %v697 = vadd.f32 %v695, %v696
  %v698 = vsel %vm650, %v492, 0.0
  %v699 = vadd.f32 %v697, %v698
  %v700 = vsel %vm650, %v495, 0.0
  %v701 = vadd.f32 %v699, %v700
  %v702 = vsel %vm650, %v500, 0.0
  %v703 = vadd.f32 %v701, %v702
  %v704 = vsel %vm650, %v503, 0.0
  %v705 = vadd.f32 %v703, %v704
  %v706 = vsel %vm650, %v508, 0.0
  %v707 = vadd.f32 %v705, %v706
  %v708 = vsel %vm650, %v511, 0.0
  %v709 = vadd.f32 %v707, %v708
  %v710 = vsel %vm650, %v516, 0.0
  %v711 = vadd.f32 %v709, %v710
  %v712 = vsel %vm650, %v519, 0.0
  %v713 = vadd.f32 %v711, %v712
  %v714 = vsel %vm650, %v524, 0.0
  %v715 = vadd.f32 %v713, %v714
  %v716 = vsel %vm650, %v527, 0.0
  %v717 = vadd.f32 %v715, %v716
  %v718 = vsel %vm650, %v532, 0.0
  %v719 = vadd.f32 %v717, %v718
  %v720 = vsel %vm650, %v535, 0.0
  %v721 = vadd.f32 %v719, %v720
  %v722 = vsel %vm650, %v540, 0.0
  %v723 = vadd.f32 %v721, %v722
  %v724 = vsel %vm650, %v543, 0.0
  %v725 = vadd.f32 %v723, %v724
  %v726 = vsel %vm650, %v548, 0.0
  %v727 = vadd.f32 %v725, %v726
  %v728 = vsel %vm650, %v551, 0.0
  %v729 = vadd.f32 %v727, %v728
  %v730 = vsel %vm650, %v556, 0.0
  %v731 = vadd.f32 %v729, %v730
  %v732 = vsel %vm650, %v559, 0.0
  %v733 = vadd.f32 %v731, %v732
  %v734 = vsel %vm650, %v564, 0.0
  %v735 = vadd.f32 %v733, %v734
  %v736 = vsel %vm650, %v567, 0.0
  %v737 = vadd.f32 %v735, %v736
  %v738 = vsel %vm650, %v572, 0.0
  %v739 = vadd.f32 %v737, %v738
  %v740 = vsel %vm650, %v575, 0.0
  %v741 = vadd.f32 %v739, %v740
  %v742 = vsel %vm650, %v580, 0.0
  %v743 = vadd.f32 %v741, %v742
  %v744 = vsel %vm650, %v583, 0.0
  %v745 = vadd.f32 %v743, %v744
  %v746 = vsel %vm650, %v588, 0.0
  %v747 = vadd.f32 %v745, %v746
  %v748 = vsel %vm650, %v591, 0.0
  %v749 = vadd.f32 %v747, %v748
  %v750 = vsel %vm650, %v596, 0.0
  %v751 = vadd.f32 %v749, %v750
  %v752 = vsel %vm650, %v599, 0.0
  %v753 = vadd.f32 %v751, %v752
  %v754 = vsel %vm650, %v604, 0.0
  %v755 = vadd.f32 %v753, %v754
  %v756 = vsel %vm650, %v607, 0.0
  %v757 = vadd.f32 %v755, %v756
  %v758 = vsel %vm650, %v612, 0.0
  %v759 = vadd.f32 %v757, %v758
  %v760 = vsel %vm650, %v615, 0.0
  %v761 = vadd.f32 %v759, %v760
  %v762 = vsel %vm650, %v620, 0.0
  %v763 = vadd.f32 %v761, %v762
  %v764 = vsel %vm650, %v623, 0.0
  %v765 = vadd.f32 %v763, %v764
  %v766 = vsel %vm650, %v628, 0.0
  %v767 = vadd.f32 %v765, %v766
  %v768 = vsel %vm650, %v631, 0.0
  %v769 = vadd.f32 %v767, %v768
  %v770 = vsel %vm650, %v636, 0.0
  %v771 = vadd.f32 %v769, %v770
  %v772 = vsel %vm650, %v639, 0.0
  %v773 = vadd.f32 %v771, %v772
  %v774 = vsel %vm650, %v644, 0.0
  %v775 = vadd.f32 %v773, %v774
  %v776 = vsel %vm650, %v647, 0.0
  %v777 = vadd.f32 %v775, %v776
  %v778 = vrot.slane %v777, 4
  %v779 = vadd.f32 %v777, %v778
  %v780 = vrot.slane %v779, 2
  %v781 = vadd.f32 %v779, %v780
  %v782 = vrot.slane %v781, 1
  %v783 = vadd.f32 %v781, %v782
  %v784 = vrcp.pop 512.0
  %v785 = vmul.f32 %v783, %v784
  %v786 = vsub.f32 %v396, %v785
  %v787 = vsub.f32 %v399, %v785
  %v788 = vsub.f32 %v404, %v785
  %v789 = vsub.f32 %v407, %v785
  %v790 = vsub.f32 %v412, %v785
  %v791 = vsub.f32 %v415, %v785
  %v792 = vsub.f32 %v420, %v785
  %v793 = vsub.f32 %v423, %v785
  %v794 = vsub.f32 %v428, %v785
  %v795 = vsub.f32 %v431, %v785
  %v796 = vsub.f32 %v436, %v785
  %v797 = vsub.f32 %v439, %v785
  %v798 = vsub.f32 %v444, %v785
  %v799 = vsub.f32 %v447, %v785
  %v800 = vsub.f32 %v452, %v785
  %v801 = vsub.f32 %v455, %v785
  %v802 = vsub.f32 %v460, %v785
  %v803 = vsub.f32 %v463, %v785
  %v804 = vsub.f32 %v468, %v785
  %v805 = vsub.f32 %v471, %v785
  %v806 = vsub.f32 %v476, %v785
  %v807 = vsub.f32 %v479, %v785
  %v808 = vsub.f32 %v484, %v785
  %v809 = vsub.f32 %v487, %v785
  %v810 = vsub.f32 %v492, %v785
  %v811 = vsub.f32 %v495, %v785
  %v812 = vsub.f32 %v500, %v785
  %v813 = vsub.f32 %v503, %v785
  %v814 = vsub.f32 %v508, %v785
  %v815 = vsub.f32 %v511, %v785
  %v816 = vsub.f32 %v516, %v785
  %v817 = vsub.f32 %v519, %v785
  %v818 = vsub.f32 %v524, %v785
  %v819 = vsub.f32 %v527, %v785
  %v820 = vsub.f32 %v532, %v785
  %v821 = vsub.f32 %v535, %v785
  %v822 = vsub.f32 %v540, %v785
  %v823 = vsub.f32 %v543, %v785
  %v824 = vsub.f32 %v548, %v785
  %v825 = vsub.f32 %v551, %v785
  %v826 = vsub.f32 %v556, %v785
  %v827 = vsub.f32 %v559, %v785
  %v828 = vsub.f32 %v564, %v785
  %v829 = vsub.f32 %v567, %v785
  %v830 = vsub.f32 %v572, %v785
  %v831 = vsub.f32 %v575, %v785
  %v832 = vsub.f32 %v580, %v785
  %v833 = vsub.f32 %v583, %v785
  %v834 = vsub.f32 %v588, %v785
  %v835 = vsub.f32 %v591, %v785
  %v836 = vsub.f32 %v596, %v785
  %v837 = vsub.f32 %v599, %v785
  %v838 = vsub.f32 %v604, %v785
  %v839 = vsub.f32 %v607, %v785
  %v840 = vsub.f32 %v612, %v785
  %v841 = vsub.f32 %v615, %v785
  %v842 = vsub.f32 %v620, %v785
  %v843 = vsub.f32 %v623, %v785
  %v844 = vsub.f32 %v628, %v785
  %v845 = vsub.f32 %v631, %v785
  %v846 = vsub.f32 %v636, %v785
  %v847 = vsub.f32 %v639, %v785
  %v848 = vsub.f32 %v644, %v785
  %v849 = vsub.f32 %v647, %v785
  %v850 = vmul.f32 %v786, %v786
  %v851 = vmul.f32 %v787, %v787
  %v852 = vmul.f32 %v788, %v788
  %v853 = vmul.f32 %v789, %v789
  %v854 = vmul.f32 %v790, %v790
  %v855 = vmul.f32 %v791, %v791
  %v856 = vmul.f32 %v792, %v792
  %v857 = vmul.f32 %v793, %v793
  %v858 = vmul.f32 %v794, %v794
  %v859 = vmul.f32 %v795, %v795
  %v860 = vmul.f32 %v796, %v796
  %v861 = vmul.f32 %v797, %v797
  %v862 = vmul.f32 %v798, %v798
  %v863 = vmul.f32 %v799, %v799
  %v864 = vmul.f32 %v800, %v800
  %v865 = vmul.f32 %v801, %v801
  %v866 = vmul.f32 %v802, %v802
  %v867 = vmul.f32 %v803, %v803
  %v868 = vmul.f32 %v804, %v804
  %v869 = vmul.f32 %v805, %v805
  %v870 = vmul.f32 %v806, %v806
  %v871 = vmul.f32 %v807, %v807
  %v872 = vmul.f32 %v808, %v808
  %v873 = vmul.f32 %v809, %v809
  %v874 = vmul.f32 %v810, %v810
  %v875 = vmul.f32 %v811, %v811
  %v876 = vmul.f32 %v812, %v812
  %v877 = vmul.f32 %v813, %v813
  %v878 = vmul.f32 %v814, %v814
  %v879 = vmul.f32 %v815, %v815
  %v880 = vmul.f32 %v816, %v816
  %v881 = vmul.f32 %v817, %v817
  %v882 = vmul.f32 %v818, %v818
  %v883 = vmul.f32 %v819, %v819
  %v884 = vmul.f32 %v820, %v820
  %v885 = vmul.f32 %v821, %v821
  %v886 = vmul.f32 %v822, %v822
  %v887 = vmul.f32 %v823, %v823
  %v888 = vmul.f32 %v824, %v824
  %v889 = vmul.f32 %v825, %v825
  %v890 = vmul.f32 %v826, %v826
  %v891 = vmul.f32 %v827, %v827
  %v892 = vmul.f32 %v828, %v828
  %v893 = vmul.f32 %v829, %v829
  %v894 = vmul.f32 %v830, %v830
  %v895 = vmul.f32 %v831, %v831
  %v896 = vmul.f32 %v832, %v832
  %v897 = vmul.f32 %v833, %v833
  %v898 = vmul.f32 %v834, %v834
  %v899 = vmul.f32 %v835, %v835
  %v900 = vmul.f32 %v836, %v836
  %v901 = vmul.f32 %v837, %v837
  %v902 = vmul.f32 %v838, %v838
  %v903 = vmul.f32 %v839, %v839
  %v904 = vmul.f32 %v840, %v840
  %v905 = vmul.f32 %v841, %v841
  %v906 = vmul.f32 %v842, %v842
  %v907 = vmul.f32 %v843, %v843
  %v908 = vmul.f32 %v844, %v844
  %v909 = vmul.f32 %v845, %v845
  %v910 = vmul.f32 %v846, %v846
  %v911 = vmul.f32 %v847, %v847
  %v912 = vmul.f32 %v848, %v848
  %v913 = vmul.f32 %v849, %v849
  %v914 = vsel %vm650, %v850, 0.0
  %v915 = vsel %vm650, %v851, 0.0
  %v916 = vadd.f32 %v914, %v915
  %v917 = vsel %vm650, %v852, 0.0
  %v918 = vadd.f32 %v916, %v917
  %v919 = vsel %vm650, %v853, 0.0
  %v920 = vadd.f32 %v918, %v919
  %v921 = vsel %vm650, %v854, 0.0
  %v922 = vadd.f32 %v920, %v921
  %v923 = vsel %vm650, %v855, 0.0
  %v924 = vadd.f32 %v922, %v923
  %v925 = vsel %vm650, %v856, 0.0
  %v926 = vadd.f32 %v924, %v925
  %v927 = vsel %vm650, %v857, 0.0
  %v928 = vadd.f32 %v926, %v927
  %v929 = vsel %vm650, %v858, 0.0
  %v930 = vadd.f32 %v928, %v929
  %v931 = vsel %vm650, %v859, 0.0
  %v932 = vadd.f32 %v930, %v931
  %v933 = vsel %vm650, %v860, 0.0
  %v934 = vadd.f32 %v932, %v933
  %v935 = vsel %vm650, %v861, 0.0
  %v936 = vadd.f32 %v934, %v935
  %v937 = vsel %vm650, %v862, 0.0
  %v938 = vadd.f32 %v936, %v937
  %v939 = vsel %vm650, %v863, 0.0
  %v940 = vadd.f32 %v938, %v939
  %v941 = vsel %vm650, %v864, 0.0
  %v942 = vadd.f32 %v940, %v941
  %v943 = vsel %vm650, %v865, 0.0
  %v944 = vadd.f32 %v942, %v943
  %v945 = vsel %vm650, %v866, 0.0
  %v946 = vadd.f32 %v944, %v945
  %v947 = vsel %vm650, %v867, 0.0
  %v948 = vadd.f32 %v946, %v947
  %v949 = vsel %vm650, %v868, 0.0
  %v950 = vadd.f32 %v948, %v949
  %v951 = vsel %vm650, %v869, 0.0
  %v952 = vadd.f32 %v950, %v951
  %v953 = vsel %vm650, %v870, 0.0
  %v954 = vadd.f32 %v952, %v953
  %v955 = vsel %vm650, %v871, 0.0
  %v956 = vadd.f32 %v954, %v955
  %v957 = vsel %vm650, %v872, 0.0
  %v958 = vadd.f32 %v956, %v957
  %v959 = vsel %vm650, %v873, 0.0
  %v960 = vadd.f32 %v958, %v959
  %v961 = vsel %vm650, %v874, 0.0
  %v962 = vadd.f32 %v960, %v961
  %v963 = vsel %vm650, %v875, 0.0
  %v964 = vadd.f32 %v962, %v963
  %v965 = vsel %vm650, %v876, 0.0
  %v966 = vadd.f32 %v964, %v965
  %v967 = vsel %vm650, %v877, 0.0
  %v968 = vadd.f32 %v966, %v967
  %v969 = vsel %vm650, %v878, 0.0
  %v970 = vadd.f32 %v968, %v969
  %v971 = vsel %vm650, %v879, 0.0
  %v972 = vadd.f32 %v970, %v971
  %v973 = vsel %vm650, %v880, 0.0
  %v974 = vadd.f32 %v972, %v973
  %v975 = vsel %vm650, %v881, 0.0
  %v976 = vadd.f32 %v974, %v975
  %v977 = vsel %vm650, %v882, 0.0
  %v978 = vadd.f32 %v976, %v977
  %v979 = vsel %vm650, %v883, 0.0
  %v980 = vadd.f32 %v978, %v979
  %v981 = vsel %vm650, %v884, 0.0
  %v982 = vadd.f32 %v980, %v981
  %v983 = vsel %vm650, %v885, 0.0
  %v984 = vadd.f32 %v982, %v983
  %v985 = vsel %vm650, %v886, 0.0
  %v986 = vadd.f32 %v984, %v985
  %v987 = vsel %vm650, %v887, 0.0
  %v988 = vadd.f32 %v986, %v987
  %v989 = vsel %vm650, %v888, 0.0
  %v990 = vadd.f32 %v988, %v989
  %v991 = vsel %vm650, %v889, 0.0
  %v992 = vadd.f32 %v990, %v991
  %v993 = vsel %vm650, %v890, 0.0
  %v994 = vadd.f32 %v992, %v993
  %v995 = vsel %vm650, %v891, 0.0
  %v996 = vadd.f32 %v994, %v995
  %v997 = vsel %vm650, %v892, 0.0
  %v998 = vadd.f32 %v996, %v997
  %v999 = vsel %vm650, %v893, 0.0
  %v1000 = vadd.f32 %v998, %v999
  %v1001 = vsel %vm650, %v894, 0.0
  %v1002 = vadd.f32 %v1000, %v1001
  %v1003 = vsel %vm650, %v895, 0.0
  %v1004 = vadd.f32 %v1002, %v1003
  %v1005 = vsel %vm650, %v896, 0.0
  %v1006 = vadd.f32 %v1004, %v1005
  %v1007 = vsel %vm650, %v897, 0.0
  %v1008 = vadd.f32 %v1006, %v1007
  %v1009 = vsel %vm650, %v898, 0.0
  %v1010 = vadd.f32 %v1008, %v1009
  %v1011 = vsel %vm650, %v899, 0.0
  %v1012 = vadd.f32 %v1010, %v1011
  %v1013 = vsel %vm650, %v900, 0.0
  %v1014 = vadd.f32 %v1012, %v1013
  %v1015 = vsel %vm650, %v901, 0.0
  %v1016 = vadd.f32 %v1014, %v1015
  %v1017 = vsel %vm650, %v902, 0.0
  %v1018 = vadd.f32 %v1016, %v1017
  %v1019 = vsel %vm650, %v903, 0.0
  %v1020 = vadd.f32 %v1018, %v1019
  %v1021 = vsel %vm650, %v904, 0.0
  %v1022 = vadd.f32 %v1020, %v1021
  %v1023 = vsel %vm650, %v905, 0.0
  %v1024 = vadd.f32 %v1022, %v1023
  %v1025 = vsel %vm650, %v906, 0.0
  %v1026 = vadd.f32 %v1024, %v1025
  %v1027 = vsel %vm650, %v907, 0.0
  %v1028 = vadd.f32 %v1026, %v1027
  %v1029 = vsel %vm650, %v908, 0.0
  %v1030 = vadd.f32 %v1028, %v1029
  %v1031 = vsel %vm650, %v909, 0.0
  %v1032 = vadd.f32 %v1030, %v1031
  %v1033 = vsel %vm650, %v910, 0.0
  %v1034 = vadd.f32 %v1032, %v1033
  %v1035 = vsel %vm650, %v911, 0.0
  %v1036 = vadd.f32 %v1034, %v1035
  %v1037 = vsel %vm650, %v912, 0.0
  %v1038 = vadd.f32 %v1036, %v1037
  %v1039 = vsel %vm650, %v913, 0.0
  %v1040 = vadd.f32 %v1038, %v1039
  %v1041 = vrot.slane %v1040, 4
  %v1042 = vadd.f32 %v1040, %v1041
  %v1043 = vrot.slane %v1042, 2
  %v1044 = vadd.f32 %v1042, %v1043
  %v1045 = vrot.slane %v1044, 1
  %v1046 = vadd.f32 %v1044, %v1045
  %v1047 = vmul.f32 %v1046, %v784
  %v1048 = vadd.f32 %v1047, 1e-05
  %v1049 = vrsqrt.pop %v1048
  %v1050 = vmul.f32 %v786, %v1049
  %v1051 = vmul.f32 %v787, %v1049
  %v1052 = vmul.f32 %v788, %v1049
  %v1053 = vmul.f32 %v789, %v1049
  %v1054 = vmul.f32 %v790, %v1049
  %v1055 = vmul.f32 %v791, %v1049
  %v1056 = vmul.f32 %v792, %v1049
  %v1057 = vmul.f32 %v793, %v1049
  %v1058 = vmul.f32 %v794, %v1049
  %v1059 = vmul.f32 %v795, %v1049
  %v1060 = vmul.f32 %v796, %v1049
  %v1061 = vmul.f32 %v797, %v1049
  %v1062 = vmul.f32 %v798, %v1049
  %v1063 = vmul.f32 %v799, %v1049
  %v1064 = vmul.f32 %v800, %v1049
  %v1065 = vmul.f32 %v801, %v1049
  %v1066 = vmul.f32 %v802, %v1049
  %v1067 = vmul.f32 %v803, %v1049
  %v1068 = vmul.f32 %v804, %v1049
  %v1069 = vmul.f32 %v805, %v1049
  %v1070 = vmul.f32 %v806, %v1049
  %v1071 = vmul.f32 %v807, %v1049
  %v1072 = vmul.f32 %v808, %v1049
  %v1073 = vmul.f32 %v809, %v1049
  %v1074 = vmul.f32 %v810, %v1049
  %v1075 = vmul.f32 %v811, %v1049
  %v1076 = vmul.f32 %v812, %v1049
  %v1077 = vmul.f32 %v813, %v1049
  %v1078 = vmul.f32 %v814, %v1049
  %v1079 = vmul.f32 %v815, %v1049
  %v1080 = vmul.f32 %v816, %v1049
  %v1081 = vmul.f32 %v817, %v1049
  %v1082 = vmul.f32 %v818, %v1049
  %v1083 = vmul.f32 %v819, %v1049
  %v1084 = vmul.f32 %v820, %v1049
  %v1085 = vmul.f32 %v821, %v1049
  %v1086 = vmul.f32 %v822, %v1049
  %v1087 = vmul.f32 %v823, %v1049
  %v1088 = vmul.f32 %v824, %v1049
  %v1089 = vmul.f32 %v825, %v1049
  %v1090 = vmul.f32 %v826, %v1049
  %v1091 = vmul.f32 %v827, %v1049
  %v1092 = vmul.f32 %v828, %v1049
  %v1093 = vmul.f32 %v829, %v1049
  %v1094 = vmul.f32 %v830, %v1049
  %v1095 = vmul.f32 %v831, %v1049
  %v1096 = vmul.f32 %v832, %v1049
  %v1097 = vmul.f32 %v833, %v1049
  %v1098 = vmul.f32 %v834, %v1049
  %v1099 = vmul.f32 %v835, %v1049
  %v1100 = vmul.f32 %v836, %v1049
  %v1101 = vmul.f32 %v837, %v1049
  %v1102 = vmul.f32 %v838, %v1049
  %v1103 = vmul.f32 %v839, %v1049
  %v1104 = vmul.f32 %v840, %v1049
  %v1105 = vmul.f32 %v841, %v1049
  %v1106 = vmul.f32 %v842, %v1049
  %v1107 = vmul.f32 %v843, %v1049
  %v1108 = vmul.f32 %v844, %v1049
  %v1109 = vmul.f32 %v845, %v1049
  %v1110 = vmul.f32 %v846, %v1049
  %v1111 = vmul.f32 %v847, %v1049
  %v1112 = vmul.f32 %v848, %v1049
  %v1113 = vmul.f32 %v849, %v1049
  %v1114 = vld [vmem:[%s2] sm:$0x1]
  %v1116 = vlaneseq
  %v1117 = vshrl.u32 %v1116, 7
  %v1118 = vsub.s32 0, %v1117
  %v1119 = vrot.slane %v1114, %v1118
  %v1121 = vmul.f32 %v1050, %v1119
  %v1122 = vmul.f32 %v1051, %v1119
  %v1123 = vmul.f32 %v1052, %v1119
  %v1124 = vmul.f32 %v1053, %v1119
  %v1125 = vmul.f32 %v1054, %v1119
  %v1126 = vmul.f32 %v1055, %v1119
  %v1127 = vmul.f32 %v1056, %v1119
  %v1128 = vmul.f32 %v1057, %v1119
  %v1129 = vmul.f32 %v1058, %v1119
  %v1130 = vmul.f32 %v1059, %v1119
  %v1131 = vmul.f32 %v1060, %v1119
  %v1132 = vmul.f32 %v1061, %v1119
  %v1133 = vmul.f32 %v1062, %v1119
  %v1134 = vmul.f32 %v1063, %v1119
  %v1135 = vmul.f32 %v1064, %v1119
  %v1136 = vmul.f32 %v1065, %v1119
  %v1137 = vmul.f32 %v1066, %v1119
  %v1138 = vmul.f32 %v1067, %v1119
  %v1139 = vmul.f32 %v1068, %v1119
  %v1140 = vmul.f32 %v1069, %v1119
  %v1141 = vmul.f32 %v1070, %v1119
  %v1142 = vmul.f32 %v1071, %v1119
  %v1143 = vmul.f32 %v1072, %v1119
  %v1144 = vmul.f32 %v1073, %v1119
  %v1145 = vmul.f32 %v1074, %v1119
  %v1146 = vmul.f32 %v1075, %v1119
  %v1147 = vmul.f32 %v1076, %v1119
  %v1148 = vmul.f32 %v1077, %v1119
  %v1149 = vmul.f32 %v1078, %v1119
  %v1150 = vmul.f32 %v1079, %v1119
  %v1151 = vmul.f32 %v1080, %v1119
  %v1152 = vmul.f32 %v1081, %v1119
  %v1153 = vmul.f32 %v1082, %v1119
  %v1154 = vmul.f32 %v1083, %v1119
  %v1155 = vmul.f32 %v1084, %v1119
  %v1156 = vmul.f32 %v1085, %v1119
  %v1157 = vmul.f32 %v1086, %v1119
  %v1158 = vmul.f32 %v1087, %v1119
  %v1159 = vmul.f32 %v1088, %v1119
  %v1160 = vmul.f32 %v1089, %v1119
  %v1161 = vmul.f32 %v1090, %v1119
  %v1162 = vmul.f32 %v1091, %v1119
  %v1163 = vmul.f32 %v1092, %v1119
  %v1164 = vmul.f32 %v1093, %v1119
  %v1165 = vmul.f32 %v1094, %v1119
  %v1166 = vmul.f32 %v1095, %v1119
  %v1167 = vmul.f32 %v1096, %v1119
  %v1168 = vmul.f32 %v1097, %v1119
  %v1169 = vmul.f32 %v1098, %v1119
  %v1170 = vmul.f32 %v1099, %v1119
  %v1171 = vmul.f32 %v1100, %v1119
  %v1172 = vmul.f32 %v1101, %v1119
  %v1173 = vmul.f32 %v1102, %v1119
  %v1174 = vmul.f32 %v1103, %v1119
  %v1175 = vmul.f32 %v1104, %v1119
  %v1176 = vmul.f32 %v1105, %v1119
  %v1177 = vmul.f32 %v1106, %v1119
  %v1178 = vmul.f32 %v1107, %v1119
  %v1179 = vmul.f32 %v1108, %v1119
  %v1180 = vmul.f32 %v1109, %v1119
  %v1181 = vmul.f32 %v1110, %v1119
  %v1182 = vmul.f32 %v1111, %v1119
  %v1183 = vmul.f32 %v1112, %v1119
  %v1184 = vmul.f32 %v1113, %v1119
  %v1185 = vld [vmem:[%s3] sm:$0x1]
  %v1187 = vlaneseq
  %v1188 = vshrl.u32 %v1187, 7
  %v1189 = vsub.s32 0, %v1188
  %v1190 = vrot.slane %v1185, %v1189
  %v1192 = vadd.f32 %v1121, %v1190
  %v1193 = vadd.f32 %v1122, %v1190
  %v1194 = vadd.f32 %v1123, %v1190
  %v1195 = vadd.f32 %v1124, %v1190
  %v1196 = vadd.f32 %v1125, %v1190
  %v1197 = vadd.f32 %v1126, %v1190
  %v1198 = vadd.f32 %v1127, %v1190
  %v1199 = vadd.f32 %v1128, %v1190
  %v1200 = vadd.f32 %v1129, %v1190
  %v1201 = vadd.f32 %v1130, %v1190
  %v1202 = vadd.f32 %v1131, %v1190
  %v1203 = vadd.f32 %v1132, %v1190
  %v1204 = vadd.f32 %v1133, %v1190
  %v1205 = vadd.f32 %v1134, %v1190
  %v1206 = vadd.f32 %v1135, %v1190
  %v1207 = vadd.f32 %v1136, %v1190
  %v1208 = vadd.f32 %v1137, %v1190
  %v1209 = vadd.f32 %v1138, %v1190
  %v1210 = vadd.f32 %v1139, %v1190
  %v1211 = vadd.f32 %v1140, %v1190
  %v1212 = vadd.f32 %v1141, %v1190
  %v1213 = vadd.f32 %v1142, %v1190
  %v1214 = vadd.f32 %v1143, %v1190
  %v1215 = vadd.f32 %v1144, %v1190
  %v1216 = vadd.f32 %v1145, %v1190
  %v1217 = vadd.f32 %v1146, %v1190
  %v1218 = vadd.f32 %v1147, %v1190
  %v1219 = vadd.f32 %v1148, %v1190
  %v1220 = vadd.f32 %v1149, %v1190
  %v1221 = vadd.f32 %v1150, %v1190
  %v1222 = vadd.f32 %v1151, %v1190
  %v1223 = vadd.f32 %v1152, %v1190
  %v1224 = vadd.f32 %v1153, %v1190
  %v1225 = vadd.f32 %v1154, %v1190
  %v1226 = vadd.f32 %v1155, %v1190
  %v1227 = vadd.f32 %v1156, %v1190
  %v1228 = vadd.f32 %v1157, %v1190
  %v1229 = vadd.f32 %v1158, %v1190
  %v1230 = vadd.f32 %v1159, %v1190
  %v1231 = vadd.f32 %v1160, %v1190
  %v1232 = vadd.f32 %v1161, %v1190
  %v1233 = vadd.f32 %v1162, %v1190
  %v1234 = vadd.f32 %v1163, %v1190
  %v1235 = vadd.f32 %v1164, %v1190
  %v1236 = vadd.f32 %v1165, %v1190
  %v1237 = vadd.f32 %v1166, %v1190
  %v1238 = vadd.f32 %v1167, %v1190
  %v1239 = vadd.f32 %v1168, %v1190
  %v1240 = vadd.f32 %v1169, %v1190
  %v1241 = vadd.f32 %v1170, %v1190
  %v1242 = vadd.f32 %v1171, %v1190
  %v1243 = vadd.f32 %v1172, %v1190
  %v1244 = vadd.f32 %v1173, %v1190
  %v1245 = vadd.f32 %v1174, %v1190
  %v1246 = vadd.f32 %v1175, %v1190
  %v1247 = vadd.f32 %v1176, %v1190
  %v1248 = vadd.f32 %v1177, %v1190
  %v1249 = vadd.f32 %v1178, %v1190
  %v1250 = vadd.f32 %v1179, %v1190
  %v1251 = vadd.f32 %v1180, %v1190
  %v1252 = vadd.f32 %v1181, %v1190
  %v1253 = vadd.f32 %v1182, %v1190
  %v1254 = vadd.f32 %v1183, %v1190
  %v1255 = vadd.f32 %v1184, %v1190
  %v1256 = vpack.c.bf16 %v1193, %v1192
  %v1257 = vpack.c.bf16 %v1195, %v1194
  %v1258 = vpack.c.bf16 %v1197, %v1196
  %v1259 = vpack.c.bf16 %v1199, %v1198
  %v1260 = vpack.c.bf16 %v1201, %v1200
  %v1261 = vpack.c.bf16 %v1203, %v1202
  %v1262 = vpack.c.bf16 %v1205, %v1204
  %v1263 = vpack.c.bf16 %v1207, %v1206
  %v1264 = vpack.c.bf16 %v1209, %v1208
  %v1265 = vpack.c.bf16 %v1211, %v1210
  %v1266 = vpack.c.bf16 %v1213, %v1212
  %v1267 = vpack.c.bf16 %v1215, %v1214
  %v1268 = vpack.c.bf16 %v1217, %v1216
  %v1269 = vpack.c.bf16 %v1219, %v1218
  %v1270 = vpack.c.bf16 %v1221, %v1220
  %v1271 = vpack.c.bf16 %v1223, %v1222
  %v1272 = vpack.c.bf16 %v1225, %v1224
  %v1273 = vpack.c.bf16 %v1227, %v1226
  %v1274 = vpack.c.bf16 %v1229, %v1228
  %v1275 = vpack.c.bf16 %v1231, %v1230
  %v1276 = vpack.c.bf16 %v1233, %v1232
  %v1277 = vpack.c.bf16 %v1235, %v1234
  %v1278 = vpack.c.bf16 %v1237, %v1236
  %v1279 = vpack.c.bf16 %v1239, %v1238
  %v1280 = vpack.c.bf16 %v1241, %v1240
  %v1281 = vpack.c.bf16 %v1243, %v1242
  %v1282 = vpack.c.bf16 %v1245, %v1244
  %v1283 = vpack.c.bf16 %v1247, %v1246
  %v1284 = vpack.c.bf16 %v1249, %v1248
  %v1285 = vpack.c.bf16 %v1251, %v1250
  %v1286 = vpack.c.bf16 %v1253, %v1252
  %v1287 = vpack.c.bf16 %v1255, %v1254
  %v1320 = vunpack.c.l.b16 %v1256
  %v1321 = vunpack.c.h.b16 %v1256
  %v1322 = vunpack.c.l.b16 %v1257
  %v1323 = vunpack.c.h.b16 %v1257
  %v1324 = vunpack.c.l.b16 %v1258
  %v1325 = vunpack.c.h.b16 %v1258
  %v1326 = vunpack.c.l.b16 %v1259
  %v1327 = vunpack.c.h.b16 %v1259
  %v1328 = vunpack.c.l.b16 %v1260
  %v1329 = vunpack.c.h.b16 %v1260
  %v1330 = vunpack.c.l.b16 %v1261
  %v1331 = vunpack.c.h.b16 %v1261
  %v1332 = vunpack.c.l.b16 %v1262
  %v1333 = vunpack.c.h.b16 %v1262
  %v1334 = vunpack.c.l.b16 %v1263
  %v1335 = vunpack.c.h.b16 %v1263
  %v1336 = vunpack.c.l.b16 %v1264
  %v1337 = vunpack.c.h.b16 %v1264
  %v1338 = vunpack.c.l.b16 %v1265
  %v1339 = vunpack.c.h.b16 %v1265
  %v1340 = vunpack.c.l.b16 %v1266
  %v1341 = vunpack.c.h.b16 %v1266
  %v1342 = vunpack.c.l.b16 %v1267
  %v1343 = vunpack.c.h.b16 %v1267
  %v1344 = vunpack.c.l.b16 %v1268
  %v1345 = vunpack.c.h.b16 %v1268
  %v1346 = vunpack.c.l.b16 %v1269
  %v1347 = vunpack.c.h.b16 %v1269
  %v1348 = vunpack.c.l.b16 %v1270
  %v1349 = vunpack.c.h.b16 %v1270
  %v1350 = vunpack.c.l.b16 %v1271
  %v1351 = vunpack.c.h.b16 %v1271
  %v1352 = vunpack.c.l.b16 %v1272
  %v1353 = vunpack.c.h.b16 %v1272
  %v1354 = vunpack.c.l.b16 %v1273
  %v1355 = vunpack.c.h.b16 %v1273
  %v1356 = vunpack.c.l.b16 %v1274
  %v1357 = vunpack.c.h.b16 %v1274
  %v1358 = vunpack.c.l.b16 %v1275
  %v1359 = vunpack.c.h.b16 %v1275
  %v1360 = vunpack.c.l.b16 %v1276
  %v1361 = vunpack.c.h.b16 %v1276
  %v1362 = vunpack.c.l.b16 %v1277
  %v1363 = vunpack.c.h.b16 %v1277
  %v1364 = vunpack.c.l.b16 %v1278
  %v1365 = vunpack.c.h.b16 %v1278
  %v1366 = vunpack.c.l.b16 %v1279
  %v1367 = vunpack.c.h.b16 %v1279
  %v1368 = vunpack.c.l.b16 %v1280
  %v1369 = vunpack.c.h.b16 %v1280
  %v1370 = vunpack.c.l.b16 %v1281
  %v1371 = vunpack.c.h.b16 %v1281
  %v1372 = vunpack.c.l.b16 %v1282
  %v1373 = vunpack.c.h.b16 %v1282
  %v1374 = vunpack.c.l.b16 %v1283
  %v1375 = vunpack.c.h.b16 %v1283
  %v1376 = vunpack.c.l.b16 %v1284
  %v1377 = vunpack.c.h.b16 %v1284
  %v1378 = vunpack.c.l.b16 %v1285
  %v1379 = vunpack.c.h.b16 %v1285
  %v1380 = vunpack.c.l.b16 %v1286
  %v1381 = vunpack.c.h.b16 %v1286
  %v1382 = vunpack.c.l.b16 %v1287
  %v1383 = vunpack.c.h.b16 %v1287
  %v1384 = vpack.c.b16 %v1320, %v1320
  %v1385 = vpack.c.b16 %v1321, %v1321
  %v1386 = vpack.c.b16 %v1322, %v1322
  %v1387 = vpack.c.b16 %v1323, %v1323
  %v1388 = vpack.c.b16 %v1324, %v1324
  %v1389 = vpack.c.b16 %v1325, %v1325
  %v1390 = vpack.c.b16 %v1326, %v1326
  %v1391 = vpack.c.b16 %v1327, %v1327
  %v1392 = vpack.c.b16 %v1328, %v1328
  %v1393 = vpack.c.b16 %v1329, %v1329
  %v1394 = vpack.c.b16 %v1330, %v1330
  %v1395 = vpack.c.b16 %v1331, %v1331
  %v1396 = vpack.c.b16 %v1332, %v1332
  %v1397 = vpack.c.b16 %v1333, %v1333
  %v1398 = vpack.c.b16 %v1334, %v1334
  %v1399 = vpack.c.b16 %v1335, %v1335
  %v1400 = vpack.c.b16 %v1336, %v1336
  %v1401 = vpack.c.b16 %v1337, %v1337
  %v1402 = vpack.c.b16 %v1338, %v1338
  %v1403 = vpack.c.b16 %v1339, %v1339
  %v1404 = vpack.c.b16 %v1340, %v1340
  %v1405 = vpack.c.b16 %v1341, %v1341
  %v1406 = vpack.c.b16 %v1342, %v1342
  %v1407 = vpack.c.b16 %v1343, %v1343
  %v1408 = vpack.c.b16 %v1344, %v1344
  %v1409 = vpack.c.b16 %v1345, %v1345
  %v1410 = vpack.c.b16 %v1346, %v1346
  %v1411 = vpack.c.b16 %v1347, %v1347
  %v1412 = vpack.c.b16 %v1348, %v1348
  %v1413 = vpack.c.b16 %v1349, %v1349
  %v1414 = vpack.c.b16 %v1350, %v1350
  %v1415 = vpack.c.b16 %v1351, %v1351
  %v1416 = vpack.c.b16 %v1352, %v1352
  %v1417 = vpack.c.b16 %v1353, %v1353
  %v1418 = vpack.c.b16 %v1354, %v1354
  %v1419 = vpack.c.b16 %v1355, %v1355
  %v1420 = vpack.c.b16 %v1356, %v1356
  %v1421 = vpack.c.b16 %v1357, %v1357
  %v1422 = vpack.c.b16 %v1358, %v1358
  %v1423 = vpack.c.b16 %v1359, %v1359
  %v1424 = vpack.c.b16 %v1360, %v1360
  %v1425 = vpack.c.b16 %v1361, %v1361
  %v1426 = vpack.c.b16 %v1362, %v1362
  %v1427 = vpack.c.b16 %v1363, %v1363
  %v1428 = vpack.c.b16 %v1364, %v1364
  %v1429 = vpack.c.b16 %v1365, %v1365
  %v1430 = vpack.c.b16 %v1366, %v1366
  %v1431 = vpack.c.b16 %v1367, %v1367
  %v1432 = vpack.c.b16 %v1368, %v1368
  %v1433 = vpack.c.b16 %v1369, %v1369
  %v1434 = vpack.c.b16 %v1370, %v1370
  %v1435 = vpack.c.b16 %v1371, %v1371
  %v1436 = vpack.c.b16 %v1372, %v1372
  %v1437 = vpack.c.b16 %v1373, %v1373
  %v1438 = vpack.c.b16 %v1374, %v1374
  %v1439 = vpack.c.b16 %v1375, %v1375
  %v1440 = vpack.c.b16 %v1376, %v1376
  %v1441 = vpack.c.b16 %v1377, %v1377
  %v1442 = vpack.c.b16 %v1378, %v1378
  %v1443 = vpack.c.b16 %v1379, %v1379
  %v1444 = vpack.c.b16 %v1380, %v1380
  %v1445 = vpack.c.b16 %v1381, %v1381
  %v1446 = vpack.c.b16 %v1382, %v1382
  %v1447 = vpack.c.b16 %v1383, %v1383
  %vm1512 = vcmask 93184
  %1513 = vst.msk [vmem:[%s4] sm:$0xf] %vm1512, %v1384
  %1514 = vst.msk [vmem:[%s4 + $0x4] sm:$0xf] %vm1512, %v1385
  %1515 = vst.msk [vmem:[%s4 + $0x8] sm:$0xf] %vm1512, %v1386
  %1516 = vst.msk [vmem:[%s4 + $0xc] sm:$0xf] %vm1512, %v1387
  %1517 = vst.msk [vmem:[%s4 + $0x10] sm:$0xf] %vm1512, %v1388
  %1518 = vst.msk [vmem:[%s4 + $0x14] sm:$0xf] %vm1512, %v1389
  %1519 = vst.msk [vmem:[%s4 + $0x18] sm:$0xf] %vm1512, %v1390
  %1520 = vst.msk [vmem:[%s4 + $0x1c] sm:$0xf] %vm1512, %v1391
  %1521 = vst.msk [vmem:[%s4 + $0x20] sm:$0xf] %vm1512, %v1392
  %1522 = vst.msk [vmem:[%s4 + $0x24] sm:$0xf] %vm1512, %v1393
  %1523 = vst.msk [vmem:[%s4 + $0x28] sm:$0xf] %vm1512, %v1394
  %1524 = vst.msk [vmem:[%s4 + $0x2c] sm:$0xf] %vm1512, %v1395
  %1525 = vst.msk [vmem:[%s4 + $0x30] sm:$0xf] %vm1512, %v1396
  %1526 = vst.msk [vmem:[%s4 + $0x34] sm:$0xf] %vm1512, %v1397
  %1527 = vst.msk [vmem:[%s4 + $0x38] sm:$0xf] %vm1512, %v1398
  %1528 = vst.msk [vmem:[%s4 + $0x3c] sm:$0xf] %vm1512, %v1399
  %1529 = vst.msk [vmem:[%s4 + $0x40] sm:$0xf] %vm1512, %v1400
  %1530 = vst.msk [vmem:[%s4 + $0x44] sm:$0xf] %vm1512, %v1401
  %1531 = vst.msk [vmem:[%s4 + $0x48] sm:$0xf] %vm1512, %v1402
  %1532 = vst.msk [vmem:[%s4 + $0x4c] sm:$0xf] %vm1512, %v1403
  %1533 = vst.msk [vmem:[%s4 + $0x50] sm:$0xf] %vm1512, %v1404
  %1534 = vst.msk [vmem:[%s4 + $0x54] sm:$0xf] %vm1512, %v1405
  %1535 = vst.msk [vmem:[%s4 + $0x58] sm:$0xf] %vm1512, %v1406
  %1536 = vst.msk [vmem:[%s4 + $0x5c] sm:$0xf] %vm1512, %v1407
  %1537 = vst.msk [vmem:[%s4 + $0x60] sm:$0xf] %vm1512, %v1408
  %1538 = vst.msk [vmem:[%s4 + $0x64] sm:$0xf] %vm1512, %v1409
  %1539 = vst.msk [vmem:[%s4 + $0x68] sm:$0xf] %vm1512, %v1410
  %1540 = vst.msk [vmem:[%s4 + $0x6c] sm:$0xf] %vm1512, %v1411
  %1541 = vst.msk [vmem:[%s4 + $0x70] sm:$0xf] %vm1512, %v1412
  %1542 = vst.msk [vmem:[%s4 + $0x74] sm:$0xf] %vm1512, %v1413
  %1543 = vst.msk [vmem:[%s4 + $0x78] sm:$0xf] %vm1512, %v1414
  %1544 = vst.msk [vmem:[%s4 + $0x7c] sm:$0xf] %vm1512, %v1415
  %1545 = vst.msk [vmem:[%s4 + $0x80] sm:$0xf] %vm1512, %v1416
  %1546 = vst.msk [vmem:[%s4 + $0x84] sm:$0xf] %vm1512, %v1417
  %1547 = vst.msk [vmem:[%s4 + $0x88] sm:$0xf] %vm1512, %v1418
  %1548 = vst.msk [vmem:[%s4 + $0x8c] sm:$0xf] %vm1512, %v1419
  %1549 = vst.msk [vmem:[%s4 + $0x90] sm:$0xf] %vm1512, %v1420
  %1550 = vst.msk [vmem:[%s4 + $0x94] sm:$0xf] %vm1512, %v1421
  %1551 = vst.msk [vmem:[%s4 + $0x98] sm:$0xf] %vm1512, %v1422
  %1552 = vst.msk [vmem:[%s4 + $0x9c] sm:$0xf] %vm1512, %v1423
  %1553 = vst.msk [vmem:[%s4 + $0xa0] sm:$0xf] %vm1512, %v1424
  %1554 = vst.msk [vmem:[%s4 + $0xa4] sm:$0xf] %vm1512, %v1425
  %1555 = vst.msk [vmem:[%s4 + $0xa8] sm:$0xf] %vm1512, %v1426
  %1556 = vst.msk [vmem:[%s4 + $0xac] sm:$0xf] %vm1512, %v1427
  %1557 = vst.msk [vmem:[%s4 + $0xb0] sm:$0xf] %vm1512, %v1428
  %1558 = vst.msk [vmem:[%s4 + $0xb4] sm:$0xf] %vm1512, %v1429
  %1559 = vst.msk [vmem:[%s4 + $0xb8] sm:$0xf] %vm1512, %v1430
  %1560 = vst.msk [vmem:[%s4 + $0xbc] sm:$0xf] %vm1512, %v1431
  %1561 = vst.msk [vmem:[%s4 + $0xc0] sm:$0xf] %vm1512, %v1432
  %1562 = vst.msk [vmem:[%s4 + $0xc4] sm:$0xf] %vm1512, %v1433
  %1563 = vst.msk [vmem:[%s4 + $0xc8] sm:$0xf] %vm1512, %v1434
  %1564 = vst.msk [vmem:[%s4 + $0xcc] sm:$0xf] %vm1512, %v1435
  %1565 = vst.msk [vmem:[%s4 + $0xd0] sm:$0xf] %vm1512, %v1436
  %1566 = vst.msk [vmem:[%s4 + $0xd4] sm:$0xf] %vm1512, %v1437
  %1567 = vst.msk [vmem:[%s4 + $0xd8] sm:$0xf] %vm1512, %v1438
  %1568 = vst.msk [vmem:[%s4 + $0xdc] sm:$0xf] %vm1512, %v1439
  %1569 = vst.msk [vmem:[%s4 + $0xe0] sm:$0xf] %vm1512, %v1440
  %1570 = vst.msk [vmem:[%s4 + $0xe4] sm:$0xf] %vm1512, %v1441
  %1571 = vst.msk [vmem:[%s4 + $0xe8] sm:$0xf] %vm1512, %v1442
  %1572 = vst.msk [vmem:[%s4 + $0xec] sm:$0xf] %vm1512, %v1443
  %1573 = vst.msk [vmem:[%s4 + $0xf0] sm:$0xf] %vm1512, %v1444
  %1574 = vst.msk [vmem:[%s4 + $0xf4] sm:$0xf] %vm1512, %v1445
  %1575 = vst.msk [vmem:[%s4 + $0xf8] sm:$0xf] %vm1512, %v1446
  %1576 = vst.msk [vmem:[%s4 + $0xfc] sm:$0xf] %vm1512, %v1447
  // Predicated region
  $region18: #{fused_matmul.1} parent=0 // pred_check
    _
  $region19: #{fused_matmul.1} parent=0 // pred_check_branch
    %1578 = sbr.rel (0) target = $region21
  $region20: #{fused_matmul.1} parent=0 // pred_region
    _
  $region21: #{fused_matmul.1} parent=0 // pred_fallthru
    _
  // Predicated region
  $region22: #{fused_matmul.1} parent=0 // pred_check
    _
  $region23: #{fused_matmul.1} parent=0 // pred_check_branch
    %1580 = sbr.rel (0) target = $region25
  $region24: #{fused_matmul.1} parent=0 // pred_region
    _
  $region25: #{fused_matmul.1} parent=0 // pred_fallthru
    _

</llo_original>
